<compile_context>
chip_gen: v7x
topology: tpu7x:2x2x1
jax: 0.10.0
libtpu: 0.0.40
codegen_flags: <defaults>
</compile_context>

<pallas_src>
import functools

import jax
import jax.numpy as jnp
from jax.experimental import pallas as pl
from jax.experimental.pallas import tpu as pltpu


# ---------------------------------------------------------------------------
# Fused matmul kernel:  out(R, TM) = sum_i W_i(R, K_i) @ P_i(K_i, TM)
#                       -> per-row scale/shift (BN affine or bias) -> optional ReLU
# Lane dim = TM (voxels), sublane dim = R (channels).
# ---------------------------------------------------------------------------
def _make_fused_matmul_kernel(n_pairs, relu):
    def kernel(*refs):
        # refs = [w_0, p_0, ..., w_{n-1}, p_{n-1}, scale, shift, out]
        scale_ref = refs[2 * n_pairs]
        shift_ref = refs[2 * n_pairs + 1]
        o_ref = refs[-1]
        acc = jnp.dot(refs[0][...], refs[1][...],
                      preferred_element_type=jnp.float32)
        for idx in range(1, n_pairs):
            acc = acc + jnp.dot(refs[2 * idx][...], refs[2 * idx + 1][...],
                                preferred_element_type=jnp.float32)
        y = acc * scale_ref[...] + shift_ref[...]      # f32 epilogue
        if relu:
            y = jnp.maximum(y, 0.0)
        o_ref[...] = y.astype(o_ref.dtype)
    return kernel


def _round_up(x, m):
    return ((x + m - 1) // m) * m


def _pick_tile(mp):
    # Largest lane-dense tile that still leaves >=2 grid steps when possible
    # (dual-TC on v7x); mp is always a multiple of 128.
    cands = [t for t in (512, 256, 128) if mp % t == 0]
    for t in cands:
        if mp // t >= 2:
            return t
    return cands[-1]


def fused_matmul(pairs, scale, shift, relu,
                 compute_dtype=jnp.bfloat16, out_dtype=jnp.float32):
    """pairs: list of (W_i (R, K_i), P_i (K_i, M)); returns (R, M) f32."""
    R = pairs[0][0].shape[0]
    M = pairs[0][1].shape[1]
    Mp = _round_up(M, 128)
    tm = _pick_tile(Mp)

    args, in_specs = [], []
    for w, p in pairs:
        w = w.astype(compute_dtype)
        p = p.astype(compute_dtype)
        if Mp != M:
            p = jnp.pad(p, ((0, 0), (0, Mp - M)))
        K = w.shape[1]
        in_specs.append(pl.BlockSpec((R, K), lambda i: (0, 0)))     # weight: whole
        in_specs.append(pl.BlockSpec((K, tm), lambda i: (0, i)))    # patches: M-tiled
        args += [w, p]
    in_specs.append(pl.BlockSpec((R, 1), lambda i: (0, 0)))         # scale
    in_specs.append(pl.BlockSpec((R, 1), lambda i: (0, 0)))         # shift
    args += [scale.astype(jnp.float32).reshape(R, 1),
             shift.astype(jnp.float32).reshape(R, 1)]

    # TODO(synk): K (=27*Cin) is not tiled; for large channel counts add a K grid
    # axis ("arbitrary") with a VMEM accumulator and pl.when init/finalize.
    out = pl.pallas_call(
        _make_fused_matmul_kernel(len(pairs), relu),
        out_shape=jax.ShapeDtypeStruct((R, Mp), out_dtype),
        grid=(Mp // tm,),
        in_specs=in_specs,
        out_specs=pl.BlockSpec((R, tm), lambda i: (0, i)),
        compiler_params=pltpu.CompilerParams(dimension_semantics=("parallel",)),
    )(*args)
    return out[:, :M] if Mp != M else out


# ---------------------------------------------------------------------------
# im2col for a 3x3x3 / pad=1 conv in channel-major layout.
#   x_cf: (C, N, D, H, W)  ->  patches (27*C, N*D*H*W); row index = tap*C + c,
#   tap = (kd*3 + kh)*3 + kw; column index = flat (n, d, h, w).
# ---------------------------------------------------------------------------
def _im2col_3x3x3(x_cf):
    C, N, D, H, W = x_cf.shape
    xp = jnp.pad(x_cf, ((0, 0), (0, 0), (1, 1), (1, 1), (1, 1)))
    slabs = []
    for kd in range(3):
        for kh in range(3):
            for kw in range(3):
                slabs.append(xp[:, :, kd:kd + D, kh:kh + H, kw:kw + W])
    p = jnp.stack(slabs, axis=0)                       # (27, C, N, D, H, W)
    return p.reshape(27 * C, N * D * H * W)
    # TODO(synk): for production sizes the patch gather should move into the
    # kernel (D-tiles with halos) instead of materializing 27x patches in HBM.


def _conv3_weight_slab(w_ocdhw):
    """PyTorch Conv3d weight (Cout, Cin, 3,3,3) -> (Cout, 27*Cin), row order
    matching _im2col_3x3x3 (tap-major, channel-minor)."""
    Cout, Cin = w_ocdhw.shape[:2]
    return jnp.transpose(w_ocdhw, (0, 2, 3, 4, 1)).reshape(Cout, 27 * Cin)


# ---------------------------------------------------------------------------
# Full UpConv3DBlock forward (eval-mode BatchNorm).
# ---------------------------------------------------------------------------
def upconv3d_block(x_ncdhw, residual_ncdhw, params, eps=1e-5,
                   compute_dtype=jnp.bfloat16):
    f32 = jnp.float32
    N, Cin, D, H, W = x_ncdhw.shape
    mid = params["up_b"].shape[0]

    # ---- ConvTranspose3d(kernel=2, stride=2): one lane-dense matmul ----------
    x_cf = jnp.transpose(x_ncdhw, (1, 0, 2, 3, 4)).reshape(Cin, N * D * H * W)
    # weight (Cin, Cout, 2,2,2) -> rows ordered (kd, kh, kw, cout)
    w_up = jnp.transpose(params["up_w"], (2, 3, 4, 1, 0)).reshape(8 * mid, Cin)
    b_up = jnp.tile(params["up_b"], 8)                  # per-row bias (tap-major)
    y8 = fused_matmul([(w_up, x_cf)],
                      scale=jnp.ones((8 * mid,), f32), shift=b_up,
                      relu=False, compute_dtype=compute_dtype)
    y8 = y8.reshape(2, 2, 2, mid, N, D, H, W)           # (kd,kh,kw,co,n,d,h,w)
    up_cf = jnp.transpose(y8, (3, 4, 5, 0, 6, 1, 7, 2)) # (co,n,d,kd,h,kh,w,kw)
    up_cf = up_cf.reshape(mid, N, 2 * D, 2 * H, 2 * W)
    # TODO(synk): the 2x2x2 interleave above is an XLA transpose; it could be
    # fused into conv1's patch gather to save one HBM pass on the upsampled volume.

    Do, Ho, Wo = 2 * D, 2 * H, 2 * W

    # ---- conv1 + BN1 + ReLU (residual concat fused via weight split) ---------
    s1 = params["bn1_gamma"] / jnp.sqrt(params["bn1_var"] + eps)
    t1 = params["bn1_beta"] + (params["c1_b"] - params["bn1_mean"]) * s1
    w1 = params["c1_w"]                                  # (mid, mid+res, 3,3,3)
    pairs = [(_conv3_weight_slab(w1[:, :mid]),
              _im2col_3x3x3(up_cf.astype(compute_dtype)))]
    if residual_ncdhw is not None:
        r_cf = jnp.transpose(residual_ncdhw, (1, 0, 2, 3, 4))
        pairs.append((_conv3_weight_slab(w1[:, mid:]),
                      _im2col_3x3x3(r_cf.astype(compute_dtype))))
    h1 = fused_matmul(pairs, scale=s1, shift=t1, relu=True,
                      compute_dtype=compute_dtype)
    h1_cf = h1.reshape(mid, N, Do, Ho, Wo)

    # ---- conv2 + BN2 + ReLU ---------------------------------------------------
    s2 = params["bn2_gamma"] / jnp.sqrt(params["bn2_var"] + eps)
    t2 = params["bn2_beta"] + (params["c2_b"] - params["bn2_mean"]) * s2
    h2 = fused_matmul([(_conv3_weight_slab(params["c2_w"]),
                        _im2col_3x3x3(h1_cf.astype(compute_dtype)))],
                      scale=s2, shift=t2, relu=True, compute_dtype=compute_dtype)
    h2_cf = h2.reshape(mid, N, Do, Ho, Wo)

    # ---- final 1x1x1 conv (last_layer=True) -----------------------------------
    if "f_w" in params:
        nc = params["f_w"].shape[0]
        out = fused_matmul([(params["f_w"], h2_cf.reshape(mid, -1))],
                           scale=jnp.ones((nc,), f32), shift=params["f_b"],
                           relu=False, compute_dtype=compute_dtype)
        out_cf = out.reshape(nc, N, Do, Ho, Wo)
    else:
        out_cf = h2_cf

    return jnp.transpose(out_cf, (1, 0, 2, 3, 4))        # back to NCDHW


# ---------------------------------------------------------------------------
# Independent pure-jnp reference (PyTorch semantics, same bf16 operand rounding
# so only accumulation-order differences remain).
# ---------------------------------------------------------------------------
def _q(a, dt):
    return a.astype(dt).astype(jnp.float32)


def _ref_forward(x, residual, params, eps=1e-5, compute_dtype=jnp.bfloat16):
    f32 = jnp.float32
    N, Ci, D, H, W = x.shape
    mid = params["up_b"].shape[0]

    xq, wq = _q(x, compute_dtype), _q(params["up_w"], compute_dtype)
    up = jnp.zeros((N, mid, 2 * D, 2 * H, 2 * W), f32)
    for kd in range(2):
        for kh in range(2):
            for kw in range(2):
                c = jnp.einsum("ncdhw,co->nodhw", xq, wq[:, :, kd, kh, kw],
                               precision="highest")
                up = up.at[:, :, kd::2, kh::2, kw::2].set(c)
    up = up + params["up_b"].reshape(1, mid, 1, 1, 1)

    y = up if residual is None else jnp.concatenate([up, residual], axis=1)

    def conv3_bn_relu(z, w, b, g, beta, m, v):
        zq, wqq = _q(z, compute_dtype), _q(w, compute_dtype)
        Np, C, Dd, Hh, Ww = z.shape
        zp = jnp.pad(zq, ((0, 0), (0, 0), (1, 1), (1, 1), (1, 1)))
        acc = jnp.zeros((Np, w.shape[0], Dd, Hh, Ww), f32)
        for kd in range(3):
            for kh in range(3):
                for kw in range(3):
                    acc = acc + jnp.einsum(
                        "ncdhw,oc->nodhw",
                        zp[:, :, kd:kd + Dd, kh:kh + Hh, kw:kw + Ww],
                        wqq[:, :, kd, kh, kw], precision="highest")
        acc = acc + b.reshape(1, -1, 1, 1, 1)
        s = (g / jnp.sqrt(v + eps)).reshape(1, -1, 1, 1, 1)
        return jnp.maximum((acc - m.reshape(1, -1, 1, 1, 1)) * s
                           + beta.reshape(1, -1, 1, 1, 1), 0.0)

    y = conv3_bn_relu(y, params["c1_w"], params["c1_b"], params["bn1_gamma"],
                      params["bn1_beta"], params["bn1_mean"], params["bn1_var"])
    y = conv3_bn_relu(y, params["c2_w"], params["c2_b"], params["bn2_gamma"],
                      params["bn2_beta"], params["bn2_mean"], params["bn2_var"])
    if "f_w" in params:
        y = jnp.einsum("ncdhw,oc->nodhw", _q(y, compute_dtype),
                       _q(params["f_w"], compute_dtype), precision="highest") \
            + params["f_b"].reshape(1, -1, 1, 1, 1)
    return y


# ---------------------------------------------------------------------------
if __name__ == "__main__":
    # Module config: in_channels=8, res_channels=4, last_layer=True, num_classes=3
    in_channels, res_channels, num_classes = 8, 4, 3
    mid = in_channels // 2                               # 4
    N, D, H, W = 2, 4, 4, 4                              # output spatial = 8^3

    ks = jax.random.split(jax.random.PRNGKey(0), 16)
    params = {
        # PyTorch layouts:
        "up_w": 0.1 * jax.random.normal(ks[0], (in_channels, mid, 2, 2, 2), jnp.float32),
        "up_b": 0.1 * jax.random.normal(ks[1], (mid,), jnp.float32),
        "c1_w": 0.1 * jax.random.normal(ks[2], (mid, mid + res_channels, 3, 3, 3), jnp.float32),
        "c1_b": 0.1 * jax.random.normal(ks[3], (mid,), jnp.float32),
        "c2_w": 0.1 * jax.random.normal(ks[4], (mid, mid, 3, 3, 3), jnp.float32),
        "c2_b": 0.1 * jax.random.normal(ks[5], (mid,), jnp.float32),
        "bn1_gamma": 1.0 + 0.1 * jax.random.normal(ks[6], (mid,), jnp.float32),
        "bn1_beta": 0.1 * jax.random.normal(ks[7], (mid,), jnp.float32),
        "bn1_mean": 0.1 * jax.random.normal(ks[8], (mid,), jnp.float32),
        "bn1_var": 1.0 + 0.5 * jax.random.uniform(ks[9], (mid,), jnp.float32),
        "bn2_gamma": 1.0 + 0.1 * jax.random.normal(ks[10], (mid,), jnp.float32),
        "bn2_beta": 0.1 * jax.random.normal(ks[11], (mid,), jnp.float32),
        "bn2_mean": 0.1 * jax.random.normal(ks[12], (mid,), jnp.float32),
        "bn2_var": 1.0 + 0.5 * jax.random.uniform(ks[13], (mid,), jnp.float32),
        "f_w": 0.1 * jax.random.normal(ks[14], (num_classes, mid), jnp.float32),
        "f_b": 0.1 * jax.random.normal(ks[15], (num_classes,), jnp.float32),
    }

    kx, kr = jax.random.split(jax.random.PRNGKey(42))
    x = jax.random.normal(kx, (N, in_channels, D, H, W), jnp.float32)             # NCDHW
    residual = jax.random.normal(kr, (N, res_channels, 2 * D, 2 * H, 2 * W), jnp.float32)

    fwd = jax.jit(functools.partial(upconv3d_block, params=params))
    out = jax.block_until_ready(fwd(x, residual))
    assert out.shape == (N, num_classes, 2 * D, 2 * H, 2 * W), out.shape

    ref = jax.block_until_ready(
        jax.jit(functools.partial(_ref_forward, params=params))(x, residual))
    max_err = float(jnp.max(jnp.abs(out - ref)))
    if max_err > 1e-2:
        raise AssertionError(f"mismatch vs reference, max_err={max_err}")

    print("KERNEL_OK")
</pallas_src>

<mosaic_0001>
module attributes {stable_mosaic.version = 11 : i64} {
  func.func @kernel(%arg0: i32, %arg1: memref<32x8xbf16, #tpu.memory_space<vmem>>, %arg2: memref<8x128xbf16, #tpu.memory_space<vmem>>, %arg3: memref<32x1xf32, #tpu.memory_space<vmem>>, %arg4: memref<32x1xf32, #tpu.memory_space<vmem>>, %arg5: memref<32x128xf32, #tpu.memory_space<vmem>>) attributes {dimension_semantics = [#tpu.dimension_semantics<parallel>], iteration_bounds = array<i64: 1>, scalar_prefetch = 0 : i64, scratch_operands = 0 : i64, tpu.core_type = #tpu.core_type<tc>, window_params = [{pipeline_mode = #tpu.pipeline_mode<synchronous>, transform_indices = @transform_0, window_bounds = array<i64: 32, 8>}, {transform_indices = @transform_1, window_bounds = array<i64: 8, 128>}, {pipeline_mode = #tpu.pipeline_mode<synchronous>, transform_indices = @transform_2, window_bounds = array<i64: 32, 1>}, {pipeline_mode = #tpu.pipeline_mode<synchronous>, transform_indices = @transform_3, window_bounds = array<i64: 32, 1>}, {transform_indices = @transform_4, window_bounds = array<i64: 32, 128>}]} {
    %c0 = arith.constant 0 : index
    %c0_0 = arith.constant 0 : index
    %0 = vector.load %arg1[%c0, %c0_0] : memref<32x8xbf16, #tpu.memory_space<vmem>>, vector<32x8xbf16>
    %c0_1 = arith.constant 0 : index
    %c0_2 = arith.constant 0 : index
    %1 = vector.load %arg2[%c0_1, %c0_2] : memref<8x128xbf16, #tpu.memory_space<vmem>>, vector<8x128xbf16>
    %cst = arith.constant dense<0.000000e+00> : vector<32x128xf32>
    %2 = tpu.matmul %0, %1, %cst {dimension_numbers = #tpu.dot_dimension_numbers<[1], [0], [0], [1], [0, 0, 1, 1], [], []>} : vector<32x8xbf16>, vector<8x128xbf16>, vector<32x128xf32> -> vector<32x128xf32>
    %c0_3 = arith.constant 0 : index
    %c0_4 = arith.constant 0 : index
    %3 = vector.load %arg3[%c0_3, %c0_4] : memref<32x1xf32, #tpu.memory_space<vmem>>, vector<32x1xf32>
    %4 = vector.broadcast %3 : vector<32x1xf32> to vector<32x128xf32>
    %5 = arith.mulf %2, %4 : vector<32x128xf32>
    %c0_5 = arith.constant 0 : index
    %c0_6 = arith.constant 0 : index
    %6 = vector.load %arg4[%c0_5, %c0_6] : memref<32x1xf32, #tpu.memory_space<vmem>>, vector<32x1xf32>
    %7 = vector.broadcast %6 : vector<32x1xf32> to vector<32x128xf32>
    %8 = arith.addf %5, %7 : vector<32x128xf32>
    %c0_7 = arith.constant 0 : index
    %c0_8 = arith.constant 0 : index
    %9 = vector.load %arg5[%c0_7, %c0_8] : memref<32x128xf32, #tpu.memory_space<vmem>>, vector<32x128xf32>
    tpu.vector_store %arg5[%c0_7, %c0_8], %8 {strides = array<i32>} : memref<32x128xf32, #tpu.memory_space<vmem>>, vector<32x128xf32>,
    return
  }
  func.func @transform_0(%arg0: i32) -> (i32, i32) {
    %c0_i32 = arith.constant 0 : i32
    %c0_i32_0 = arith.constant 0 : i32
    %c0_i32_1 = arith.constant 0 : i32
    return %c0_i32, %c0_i32_0 : i32, i32
  }
  func.func @transform_1(%arg0: i32) -> (i32, i32) {
    %c0_i32 = arith.constant 0 : i32
    %c0_i32_0 = arith.constant 0 : i32
    return %c0_i32, %arg0 : i32, i32
  }
  func.func @transform_2(%arg0: i32) -> (i32, i32) {
    %c0_i32 = arith.constant 0 : i32
    %c0_i32_0 = arith.constant 0 : i32
    %c0_i32_1 = arith.constant 0 : i32
    return %c0_i32, %c0_i32_0 : i32, i32
  }
  func.func @transform_3(%arg0: i32) -> (i32, i32) {
    %c0_i32 = arith.constant 0 : i32
    %c0_i32_0 = arith.constant 0 : i32
    %c0_i32_1 = arith.constant 0 : i32
    return %c0_i32, %c0_i32_0 : i32, i32
  }
  func.func @transform_4(%arg0: i32) -> (i32, i32) {
    %c0_i32 = arith.constant 0 : i32
    %c0_i32_0 = arith.constant 0 : i32
    return %c0_i32, %arg0 : i32, i32
  }
}

module attributes {stable_mosaic.version = 11 : i64} {
  func.func @kernel(%arg0: i32, %arg1: memref<4x108xbf16, #tpu.memory_space<vmem>>, %arg2: memref<108x512xbf16, #tpu.memory_space<vmem>>, %arg3: memref<4x108xbf16, #tpu.memory_space<vmem>>, %arg4: memref<108x512xbf16, #tpu.memory_space<vmem>>, %arg5: memref<4x1xf32, #tpu.memory_space<vmem>>, %arg6: memref<4x1xf32, #tpu.memory_space<vmem>>, %arg7: memref<4x512xf32, #tpu.memory_space<vmem>>) attributes {dimension_semantics = [#tpu.dimension_semantics<parallel>], iteration_bounds = array<i64: 2>, scalar_prefetch = 0 : i64, scratch_operands = 0 : i64, tpu.core_type = #tpu.core_type<tc>, window_params = [{pipeline_mode = #tpu.pipeline_mode<synchronous>, transform_indices = @transform_0, window_bounds = array<i64: 4, 108>}, {transform_indices = @transform_1, window_bounds = array<i64: 108, 512>}, {pipeline_mode = #tpu.pipeline_mode<synchronous>, transform_indices = @transform_2, window_bounds = array<i64: 4, 108>}, {transform_indices = @transform_3, window_bounds = array<i64: 108, 512>}, {pipeline_mode = #tpu.pipeline_mode<synchronous>, transform_indices = @transform_4, window_bounds = array<i64: 4, 1>}, {pipeline_mode = #tpu.pipeline_mode<synchronous>, transform_indices = @transform_5, window_bounds = array<i64: 4, 1>}, {transform_indices = @transform_6, window_bounds = array<i64: 4, 512>}]} {
    %c0 = arith.constant 0 : index
    %c0_0 = arith.constant 0 : index
    %0 = vector.load %arg1[%c0, %c0_0] : memref<4x108xbf16, #tpu.memory_space<vmem>>, vector<4x108xbf16>
    %c0_1 = arith.constant 0 : index
    %c0_2 = arith.constant 0 : index
    %1 = vector.load %arg2[%c0_1, %c0_2] : memref<108x512xbf16, #tpu.memory_space<vmem>>, vector<108x512xbf16>
    %cst = arith.constant dense<0.000000e+00> : vector<4x512xf32>
    %2 = tpu.matmul %0, %1, %cst {dimension_numbers = #tpu.dot_dimension_numbers<[1], [0], [0], [1], [0, 0, 1, 1], [], []>} : vector<4x108xbf16>, vector<108x512xbf16>, vector<4x512xf32> -> vector<4x512xf32>
    %c0_3 = arith.constant 0 : index
    %c0_4 = arith.constant 0 : index
    %3 = vector.load %arg3[%c0_3, %c0_4] : memref<4x108xbf16, #tpu.memory_space<vmem>>, vector<4x108xbf16>
    %c0_5 = arith.constant 0 : index
    %c0_6 = arith.constant 0 : index
    %4 = vector.load %arg4[%c0_5, %c0_6] : memref<108x512xbf16, #tpu.memory_space<vmem>>, vector<108x512xbf16>
    %cst_7 = arith.constant dense<0.000000e+00> : vector<4x512xf32>
    %5 = tpu.matmul %3, %4, %cst_7 {dimension_numbers = #tpu.dot_dimension_numbers<[1], [0], [0], [1], [0, 0, 1, 1], [], []>} : vector<4x108xbf16>, vector<108x512xbf16>, vector<4x512xf32> -> vector<4x512xf32>
    %6 = arith.addf %2, %5 : vector<4x512xf32>
    %c0_8 = arith.constant 0 : index
    %c0_9 = arith.constant 0 : index
    %7 = vector.load %arg5[%c0_8, %c0_9] : memref<4x1xf32, #tpu.memory_space<vmem>>, vector<4x1xf32>
    %8 = vector.broadcast %7 : vector<4x1xf32> to vector<4x512xf32>
    %9 = arith.mulf %6, %8 : vector<4x512xf32>
    %c0_10 = arith.constant 0 : index
    %c0_11 = arith.constant 0 : index
    %10 = vector.load %arg6[%c0_10, %c0_11] : memref<4x1xf32, #tpu.memory_space<vmem>>, vector<4x1xf32>
    %11 = vector.broadcast %10 : vector<4x1xf32> to vector<4x512xf32>
    %12 = arith.addf %9, %11 : vector<4x512xf32>
    %cst_12 = arith.constant 0.000000e+00 : f32
    %13 = vector.broadcast %cst_12 : f32 to vector<4x512xf32>
    %14 = arith.maximumf %12, %13 : vector<4x512xf32>
    %c0_13 = arith.constant 0 : index
    %c0_14 = arith.constant 0 : index
    %15 = vector.load %arg7[%c0_13, %c0_14] : memref<4x512xf32, #tpu.memory_space<vmem>>, vector<4x512xf32>
    tpu.vector_store %arg7[%c0_13, %c0_14], %14 {strides = array<i32>} : memref<4x512xf32, #tpu.memory_space<vmem>>, vector<4x512xf32>,
    return
  }
  func.func @transform_0(%arg0: i32) -> (i32, i32) {
    %c0_i32 = arith.constant 0 : i32
    %c0_i32_0 = arith.constant 0 : i32
    %c0_i32_1 = arith.constant 0 : i32
    return %c0_i32, %c0_i32_0 : i32, i32
  }
  func.func @transform_1(%arg0: i32) -> (i32, i32) {
    %c0_i32 = arith.constant 0 : i32
    %c0_i32_0 = arith.constant 0 : i32
    return %c0_i32, %arg0 : i32, i32
  }
  func.func @transform_2(%arg0: i32) -> (i32, i32) {
    %c0_i32 = arith.constant 0 : i32
    %c0_i32_0 = arith.constant 0 : i32
    %c0_i32_1 = arith.constant 0 : i32
    return %c0_i32, %c0_i32_0 : i32, i32
  }
  func.func @transform_3(%arg0: i32) -> (i32, i32) {
    %c0_i32 = arith.constant 0 : i32
    %c0_i32_0 = arith.constant 0 : i32
    return %c0_i32, %arg0 : i32, i32
  }
  func.func @transform_4(%arg0: i32) -> (i32, i32) {
    %c0_i32 = arith.constant 0 : i32
    %c0_i32_0 = arith.constant 0 : i32
    %c0_i32_1 = arith.constant 0 : i32
    return %c0_i32, %c0_i32_0 : i32, i32
  }
  func.func @transform_5(%arg0: i32) -> (i32, i32) {
    %c0_i32 = arith.constant 0 : i32
    %c0_i32_0 = arith.constant 0 : i32
    %c0_i32_1 = arith.constant 0 : i32
    return %c0_i32, %c0_i32_0 : i32, i32
  }
  func.func @transform_6(%arg0: i32) -> (i32, i32) {
    %c0_i32 = arith.constant 0 : i32
    %c0_i32_0 = arith.constant 0 : i32
    return %c0_i32, %arg0 : i32, i32
  }
}

module attributes {stable_mosaic.version = 11 : i64} {
  func.func @kernel(%arg0: i32, %arg1: memref<4x108xbf16, #tpu.memory_space<vmem>>, %arg2: memref<108x512xbf16, #tpu.memory_space<vmem>>, %arg3: memref<4x1xf32, #tpu.memory_space<vmem>>, %arg4: memref<4x1xf32, #tpu.memory_space<vmem>>, %arg5: memref<4x512xf32, #tpu.memory_space<vmem>>) attributes {dimension_semantics = [#tpu.dimension_semantics<parallel>], iteration_bounds = array<i64: 2>, scalar_prefetch = 0 : i64, scratch_operands = 0 : i64, tpu.core_type = #tpu.core_type<tc>, window_params = [{pipeline_mode = #tpu.pipeline_mode<synchronous>, transform_indices = @transform_0, window_bounds = array<i64: 4, 108>}, {transform_indices = @transform_1, window_bounds = array<i64: 108, 512>}, {pipeline_mode = #tpu.pipeline_mode<synchronous>, transform_indices = @transform_2, window_bounds = array<i64: 4, 1>}, {pipeline_mode = #tpu.pipeline_mode<synchronous>, transform_indices = @transform_3, window_bounds = array<i64: 4, 1>}, {transform_indices = @transform_4, window_bounds = array<i64: 4, 512>}]} {
    %c0 = arith.constant 0 : index
    %c0_0 = arith.constant 0 : index
    %0 = vector.load %arg1[%c0, %c0_0] : memref<4x108xbf16, #tpu.memory_space<vmem>>, vector<4x108xbf16>
    %c0_1 = arith.constant 0 : index
    %c0_2 = arith.constant 0 : index
    %1 = vector.load %arg2[%c0_1, %c0_2] : memref<108x512xbf16, #tpu.memory_space<vmem>>, vector<108x512xbf16>
    %cst = arith.constant dense<0.000000e+00> : vector<4x512xf32>
    %2 = tpu.matmul %0, %1, %cst {dimension_numbers = #tpu.dot_dimension_numbers<[1], [0], [0], [1], [0, 0, 1, 1], [], []>} : vector<4x108xbf16>, vector<108x512xbf16>, vector<4x512xf32> -> vector<4x512xf32>
    %c0_3 = arith.constant 0 : index
    %c0_4 = arith.constant 0 : index
    %3 = vector.load %arg3[%c0_3, %c0_4] : memref<4x1xf32, #tpu.memory_space<vmem>>, vector<4x1xf32>
    %4 = vector.broadcast %3 : vector<4x1xf32> to vector<4x512xf32>
    %5 = arith.mulf %2, %4 : vector<4x512xf32>
    %c0_5 = arith.constant 0 : index
    %c0_6 = arith.constant 0 : index
    %6 = vector.load %arg4[%c0_5, %c0_6] : memref<4x1xf32, #tpu.memory_space<vmem>>, vector<4x1xf32>
    %7 = vector.broadcast %6 : vector<4x1xf32> to vector<4x512xf32>
    %8 = arith.addf %5, %7 : vector<4x512xf32>
    %cst_7 = arith.constant 0.000000e+00 : f32
    %9 = vector.broadcast %cst_7 : f32 to vector<4x512xf32>
    %10 = arith.maximumf %8, %9 : vector<4x512xf32>
    %c0_8 = arith.constant 0 : index
    %c0_9 = arith.constant 0 : index
    %11 = vector.load %arg5[%c0_8, %c0_9] : memref<4x512xf32, #tpu.memory_space<vmem>>, vector<4x512xf32>
    tpu.vector_store %arg5[%c0_8, %c0_9], %10 {strides = array<i32>} : memref<4x512xf32, #tpu.memory_space<vmem>>, vector<4x512xf32>,
    return
  }
  func.func @transform_0(%arg0: i32) -> (i32, i32) {
    %c0_i32 = arith.constant 0 : i32
    %c0_i32_0 = arith.constant 0 : i32
    %c0_i32_1 = arith.constant 0 : i32
    return %c0_i32, %c0_i32_0 : i32, i32
  }
  func.func @transform_1(%arg0: i32) -> (i32, i32) {
    %c0_i32 = arith.constant 0 : i32
    %c0_i32_0 = arith.constant 0 : i32
    return %c0_i32, %arg0 : i32, i32
  }
  func.func @transform_2(%arg0: i32) -> (i32, i32) {
    %c0_i32 = arith.constant 0 : i32
    %c0_i32_0 = arith.constant 0 : i32
    %c0_i32_1 = arith.constant 0 : i32
    return %c0_i32, %c0_i32_0 : i32, i32
  }
  func.func @transform_3(%arg0: i32) -> (i32, i32) {
    %c0_i32 = arith.constant 0 : i32
    %c0_i32_0 = arith.constant 0 : i32
    %c0_i32_1 = arith.constant 0 : i32
    return %c0_i32, %c0_i32_0 : i32, i32
  }
  func.func @transform_4(%arg0: i32) -> (i32, i32) {
    %c0_i32 = arith.constant 0 : i32
    %c0_i32_0 = arith.constant 0 : i32
    return %c0_i32, %arg0 : i32, i32
  }
}

module attributes {stable_mosaic.version = 11 : i64} {
  func.func @kernel(%arg0: i32, %arg1: memref<3x4xbf16, #tpu.memory_space<vmem>>, %arg2: memref<4x512xbf16, #tpu.memory_space<vmem>>, %arg3: memref<3x1xf32, #tpu.memory_space<vmem>>, %arg4: memref<3x1xf32, #tpu.memory_space<vmem>>, %arg5: memref<3x512xf32, #tpu.memory_space<vmem>>) attributes {dimension_semantics = [#tpu.dimension_semantics<parallel>], iteration_bounds = array<i64: 2>, scalar_prefetch = 0 : i64, scratch_operands = 0 : i64, tpu.core_type = #tpu.core_type<tc>, window_params = [{pipeline_mode = #tpu.pipeline_mode<synchronous>, transform_indices = @transform_0, window_bounds = array<i64: 3, 4>}, {transform_indices = @transform_1, window_bounds = array<i64: 4, 512>}, {pipeline_mode = #tpu.pipeline_mode<synchronous>, transform_indices = @transform_2, window_bounds = array<i64: 3, 1>}, {pipeline_mode = #tpu.pipeline_mode<synchronous>, transform_indices = @transform_3, window_bounds = array<i64: 3, 1>}, {transform_indices = @transform_4, window_bounds = array<i64: 3, 512>}]} {
    %c0 = arith.constant 0 : index
    %c0_0 = arith.constant 0 : index
    %0 = vector.load %arg1[%c0, %c0_0] : memref<3x4xbf16, #tpu.memory_space<vmem>>, vector<3x4xbf16>
    %c0_1 = arith.constant 0 : index
    %c0_2 = arith.constant 0 : index
    %1 = vector.load %arg2[%c0_1, %c0_2] : memref<4x512xbf16, #tpu.memory_space<vmem>>, vector<4x512xbf16>
    %cst = arith.constant dense<0.000000e+00> : vector<3x512xf32>
    %2 = tpu.matmul %0, %1, %cst {dimension_numbers = #tpu.dot_dimension_numbers<[1], [0], [0], [1], [0, 0, 1, 1], [], []>} : vector<3x4xbf16>, vector<4x512xbf16>, vector<3x512xf32> -> vector<3x512xf32>
    %c0_3 = arith.constant 0 : index
    %c0_4 = arith.constant 0 : index
    %3 = vector.load %arg3[%c0_3, %c0_4] : memref<3x1xf32, #tpu.memory_space<vmem>>, vector<3x1xf32>
    %4 = vector.broadcast %3 : vector<3x1xf32> to vector<3x512xf32>
    %5 = arith.mulf %2, %4 : vector<3x512xf32>
    %c0_5 = arith.constant 0 : index
    %c0_6 = arith.constant 0 : index
    %6 = vector.load %arg4[%c0_5, %c0_6] : memref<3x1xf32, #tpu.memory_space<vmem>>, vector<3x1xf32>
    %7 = vector.broadcast %6 : vector<3x1xf32> to vector<3x512xf32>
    %8 = arith.addf %5, %7 : vector<3x512xf32>
    %c0_7 = arith.constant 0 : index
    %c0_8 = arith.constant 0 : index
    %9 = vector.load %arg5[%c0_7, %c0_8] : memref<3x512xf32, #tpu.memory_space<vmem>>, vector<3x512xf32>
    tpu.vector_store %arg5[%c0_7, %c0_8], %8 {strides = array<i32>} : memref<3x512xf32, #tpu.memory_space<vmem>>, vector<3x512xf32>,
    return
  }
  func.func @transform_0(%arg0: i32) -> (i32, i32) {
    %c0_i32 = arith.constant 0 : i32
    %c0_i32_0 = arith.constant 0 : i32
    %c0_i32_1 = arith.constant 0 : i32
    return %c0_i32, %c0_i32_0 : i32, i32
  }
  func.func @transform_1(%arg0: i32) -> (i32, i32) {
    %c0_i32 = arith.constant 0 : i32
    %c0_i32_0 = arith.constant 0 : i32
    return %c0_i32, %arg0 : i32, i32
  }
  func.func @transform_2(%arg0: i32) -> (i32, i32) {
    %c0_i32 = arith.constant 0 : i32
    %c0_i32_0 = arith.constant 0 : i32
    %c0_i32_1 = arith.constant 0 : i32
    return %c0_i32, %c0_i32_0 : i32, i32
  }
  func.func @transform_3(%arg0: i32) -> (i32, i32) {
    %c0_i32 = arith.constant 0 : i32
    %c0_i32_0 = arith.constant 0 : i32
    %c0_i32_1 = arith.constant 0 : i32
    return %c0_i32, %c0_i32_0 : i32, i32
  }
  func.func @transform_4(%arg0: i32) -> (i32, i32) {
    %c0_i32 = arith.constant 0 : i32
    %c0_i32_0 = arith.constant 0 : i32
    return %c0_i32, %arg0 : i32, i32
  }
}

</mosaic_0001>

<llo_original>
// kernel: tile.0
$region0: #{tile.0}
  %s0 = inlined_call_operand.vmem [shape: f32[8,4], index: 0, kind: input, shape index: {}]
  %s1 = inlined_call_operand.vmem [shape: f32[32,1], index: 1, kind: output, shape index: {}]
  %v2 = vld [vmem:[%s0] sm:$0xff]
  %vm3 = vcmask 7168
  %4 = vst.msk [vmem:[%s1] ss:$4 sm:$0xff] %vm3, %v2
  %v5 = vld [vmem:[%s0] sm:$0xff]
  %6 = vrot.lane.b32.xlu0 %v5, 127
  %v7 = vpop.permute.xlu0 %6
  %vm8 = vcmask 7168
  %s9 = scalar_lea.vmem %s1, 1
  %10 = vst.msk [vmem:[%s9] ss:$4 sm:$0xff] %vm8, %v7
  %v11 = vld [vmem:[%s0] sm:$0xff]
  %12 = vrot.lane.b32.xlu0 %v11, 126
  %v13 = vpop.permute.xlu0 %12
  %vm14 = vcmask 7168
  %s15 = scalar_lea.vmem %s1, 2
  %16 = vst.msk [vmem:[%s15] ss:$4 sm:$0xff] %vm14, %v13
  %v17 = vld [vmem:[%s0] sm:$0xff]
  %18 = vrot.lane.b32.xlu0 %v17, 125
  %v19 = vpop.permute.xlu0 %18
  %vm20 = vcmask 7168
  %s21 = scalar_lea.vmem %s1, 3
  %22 = vst.msk [vmem:[%s21] ss:$4 sm:$0xff] %vm20, %v19

// kernel: tile.6
$region0: #{tile.6}
  #allocation2 [shape = 's32[1]{0}', space=sflag, size = 0x4, scoped, tag = 'scoped memory for tile.6']
  %s0 = inlined_call_operand.hbm [shape: f32[4], index: 0, kind: input, shape index: {}]
  %s1 = inlined_call_operand.vmem [shape: f32[8,4], index: 1, kind: output, shape index: {}]
  $region1: #{tile.6} parent=0
    #allocation0 [shape = 'u8[512]{0}', space=vmem, size = 0x400, scoped, tag = 'operand span for operand 0']
    #allocation1 [shape = 's32[1]{0}', space=sflag, size = 0x4, scoped, tag = 'scoped memory for tile.6']
    %2 = vsyncpa [#allocation1], 0
    // Predicated region
    $region2: #{tile.6} parent=1 // pred_check
      _
    $region3: #{tile.6} parent=1 // pred_check_branch
      %4 = sbr.rel (0) target = $region5
    $region4: #{tile.6} parent=1 // pred_region
      %s6 = ssub.s32 16, 16
      %7 = vsyncadd [#allocation1], %s6
      %s9 = sshll.u32 [#allocation0], 4
      %s10 = int_to_ptr.vmem [resolvable:$true] %s9
      %12 = dma.hbm_to_vmem [thread:$0]  %s0, 16, %s10, [#allocation1]
    $region5: #{tile.6} parent=1 // pred_fallthru
      _
    // Predicated region
    $region6: #{tile.6} parent=1 // pred_check
      _
    $region7: #{tile.6} parent=1 // pred_check_branch
      %14 = sbr.rel (0) target = $region9
    $region8: #{tile.6} parent=1 // pred_region
      %15 = dma.done [#allocation1], 16
    $region9: #{tile.6} parent=1 // pred_fallthru
      _
    %v16 = vld [vmem:[#allocation0] ss:$0 sm:$0xff]
    %17 = vst [vmem:[%s1] sm:$0xff] %v16
    %18 = vsyncpa [#allocation1], 1

// kernel: upconv3d_block.4
$region0: #{upconv3d_block.4}
  #allocation0 [shape = 'u32[]', space=smem, size = 0x4, offset = 0x4, fixed_abs, tag = 'smem constant byte address 0x4 - core index']
  #allocation1 [shape = 'u32[144,128]{1,0:T(1,128)}', space=vmem, size = 0x12000, scoped, tag = 'internal scratch']
  %s0 = inlined_call_operand.hbm [shape: bf16[32,8], index: 0, kind: input, shape index: {}]
  %s1 = inlined_call_operand.vmem [shape: bf16[8,128], index: 1, kind: input, shape index: {}]
  %s2 = inlined_call_operand.vmem [shape: f32[32,1], index: 2, kind: input, shape index: {}]
  %s3 = inlined_call_operand.vmem [shape: f32[32,1], index: 3, kind: input, shape index: {}]
  %s4 = inlined_call_operand.vmem [shape: f32[32,128], index: 4, kind: output, shape index: {}]
  %s5 = sld [smem:[#allocation0]]
  $region30: #{upconv3d_block.4} parent=0
    _
  %s7 = ssub.s32 1, %s5
  %s8 = scalar_select 0, %s7, %s5
  $region1: #{upconv3d_block.4} parent=0
    #allocation2 [shape = 'u8[8192]{0}', space=vmem, size = 0x2000, scoped, tag = 'input window, operand 0, single buffered']
    #allocation3 [shape = 's32[1]{0}', space=sflag, size = 0x4, scoped, tag = 'scoped memory for upconv3d_block.4']
    %9 = vsyncpa [#allocation3], 0
    // Predicated region
    $region2: #{upconv3d_block.4} parent=1 // pred_check
      _
    $region3: #{upconv3d_block.4} parent=1 // pred_check_branch
      %11 = sbr.rel (0) target = $region5
    $region4: #{upconv3d_block.4} parent=1 // pred_region
      %s13 = ssub.s32 256, 256
      %14 = vsyncadd [#allocation3], %s13
      %s15 = sshll.u32 [#allocation2], 4
      %s16 = int_to_ptr.vmem [resolvable:$true] %s15
      %21 = dma.hbm_to_vmem [thread:$0]  %s0, 256, %s16, [#allocation3], 64, 64, 4
    $region5: #{upconv3d_block.4} parent=1 // pred_fallthru
      _
    // Predicated region
    $region6: #{upconv3d_block.4} parent=1 // pred_check
      _
    $region7: #{upconv3d_block.4} parent=1 // pred_check_branch
      %23 = sbr.rel (0) target = $region9
    $region8: #{upconv3d_block.4} parent=1 // pred_region
      _
    $region9: #{upconv3d_block.4} parent=1 // pred_fallthru
      _
    // Predicated region
    $region10: #{upconv3d_block.4} parent=1 // pred_check
      _
    $region11: #{upconv3d_block.4} parent=1 // pred_check_branch
      %25 = sbr.rel (0) target = $region13
    $region12: #{upconv3d_block.4} parent=1 // pred_region
      _
    $region13: #{upconv3d_block.4} parent=1 // pred_fallthru
      _
    // Predicated region
    $region14: #{upconv3d_block.4} parent=1 // pred_check
      _
    $region15: #{upconv3d_block.4} parent=1 // pred_check_branch
      %27 = sbr.rel (0) target = $region17
    $region16: #{upconv3d_block.4} parent=1 // pred_region
      _
    $region17: #{upconv3d_block.4} parent=1 // pred_fallthru
      _
    // Predicated region
    $region18: #{upconv3d_block.4} parent=1 // pred_check
      _
    $region19: #{upconv3d_block.4} parent=1 // pred_check_branch
      %29 = sbr.rel (0) target = $region21
    $region20: #{upconv3d_block.4} parent=1 // pred_region
      %30 = dma.done [#allocation3], 256
    $region21: #{upconv3d_block.4} parent=1 // pred_fallthru
      _
    %v32 = vld [vmem:[#allocation2] sm:$0xf]
    %v33 = vld [vmem:[#allocation2 + $0x4] sm:$0xf]
    %v34 = vld [vmem:[#allocation2 + $0x8] sm:$0xf]
    %v35 = vld [vmem:[#allocation2 + $0xc] sm:$0xf]
    %v36 = vld [vmem:[%s1] sm:$0xf]
    %v41 = vunpack.c.l.b16 %v32
    %v42 = vunpack.c.l.b16 %v33
    %v43 = vunpack.c.l.b16 %v34
    %v44 = vunpack.c.l.b16 %v35
    %v45 = vpack.c.b16 %v42, %v41
    %v46 = vpack.c.b16 %v44, %v43
    %vm47 = vcmask 64512
    %v49 = vsel %vm47, %v45, 0
    %v52 = vsel %vm47, %v46, 0
    %vm54 = vcmask 1043456
    %v56 = vsel %vm54, %v36, 0
    %58 = vmatprep.subr.bf16.mxu0 0
    %59 = vmatpush1.bf16.msra.mxu0 %v56
    %60 = vmatprep.subr.bf16.mxu0 0
    %61 = vmatpush1.bf16.msra.mxu0 0
    %62 = vmatprep.subr.bf16.mxu0 0
    %63 = vmatpush1.bf16.msra.mxu0 0
    %64 = vmatprep.subr.bf16.mxu0 0
    %65 = vmatpush1.bf16.msra.mxu0 0
    %66 = vmatprep.subr.bf16.mxu0 0
    %67 = vmatpush1.bf16.msra.mxu0 0
    %68 = vmatprep.subr.bf16.mxu0 0
    %69 = vmatpush1.bf16.msra.mxu0 0
    %70 = vmatprep.subr.bf16.mxu0 0
    %71 = vmatpush1.bf16.msra.mxu0 0
    %72 = vmatprep.subr.bf16.mxu0 0
    %73 = vmatpush1.bf16.msra.mxu0 0
    %74 = vmatprep.subr.bf16.mxu0 0
    %75 = vmatpush1.bf16.msra.mxu0 0
    %76 = vmatprep.subr.bf16.mxu0 0
    %77 = vmatpush1.bf16.msra.mxu0 0
    %78 = vmatprep.subr.bf16.mxu0 0
    %79 = vmatpush1.bf16.msra.mxu0 0
    %80 = vmatprep.subr.bf16.mxu0 0
    %81 = vmatpush1.bf16.msra.mxu0 0
    %82 = vmatprep.subr.bf16.mxu0 0
    %83 = vmatpush1.bf16.msra.mxu0 0
    %84 = vmatprep.subr.bf16.mxu0 0
    %85 = vmatpush1.bf16.msra.mxu0 0
    %86 = vmatprep.subr.bf16.mxu0 0
    %87 = vmatpush1.bf16.msra.mxu0 0
    %88 = vmatprep.subr.bf16.mxu0 0
    %89 = vmatpush1.bf16.msra.mxu0 0
    %90 = vmatprep.mubr.bf16.mxu0 0
    %91 = vmatmul.mubr.bf16.gmra.mrb[0].mxu0 %v49
    %v92 = vpop.f32.mrb[0].mxu0
    %v93 = vadd.f32 0.0, %v92
    %v94 = vpop.f32.mrb[0].mxu0
    %v95 = vpop.f32.mrb[0].mxu0
    %v96 = vadd.f32 0.0, %v95
    %v97 = vpop.f32.mrb[0].mxu0
    %98 = vmatprep.mubr.bf16.mxu0 0
    %99 = vmatmul.mubr.bf16.gmra.mrb[0].mxu0 %v52
    %v100 = vpop.f32.mrb[0].mxu0
    %v101 = vadd.f32 0.0, %v100
    %v102 = vpop.f32.mrb[0].mxu0
    %v103 = vpop.f32.mrb[0].mxu0
    %v104 = vadd.f32 0.0, %v103
    %v105 = vpop.f32.mrb[0].mxu0
    %106 = vdwg.mxu0
    %v107 = vld [vmem:[%s2] sm:$0xff]
    %v108 = vld [vmem:[%s2 + $0x8] sm:$0xff]
    %v109 = vld [vmem:[%s2 + $0x10] sm:$0xff]
    %v110 = vld [vmem:[%s2 + $0x18] sm:$0xff]
    %112 = vset.pattern.permute.xlu0 0
    %113 = vperm.xlu0 %112, %v107
    %v114 = vpop.permute.xlu0 %113
    %117 = vset.pattern.permute.xlu0 0
    %118 = vperm.xlu0 %117, %v108
    %v119 = vpop.permute.xlu0 %118
    %122 = vset.pattern.permute.xlu0 0
    %123 = vperm.xlu0 %122, %v109
    %v124 = vpop.permute.xlu0 %123
    %127 = vset.pattern.permute.xlu0 0
    %128 = vperm.xlu0 %127, %v110
    %v129 = vpop.permute.xlu0 %128
    %v131 = vmul.f32 %v93, %v114
    %v132 = vmul.f32 %v96, %v119
    %v133 = vmul.f32 %v101, %v124
    %v134 = vmul.f32 %v104, %v129
    %v135 = vld [vmem:[%s3] sm:$0xff]
    %v136 = vld [vmem:[%s3 + $0x8] sm:$0xff]
    %v137 = vld [vmem:[%s3 + $0x10] sm:$0xff]
    %v138 = vld [vmem:[%s3 + $0x18] sm:$0xff]
    %140 = vset.pattern.permute.xlu0 0
    %141 = vperm.xlu0 %140, %v135
    %v142 = vpop.permute.xlu0 %141
    %145 = vset.pattern.permute.xlu0 0
    %146 = vperm.xlu0 %145, %v136
    %v147 = vpop.permute.xlu0 %146
    %150 = vset.pattern.permute.xlu0 0
    %151 = vperm.xlu0 %150, %v137
    %v152 = vpop.permute.xlu0 %151
    %155 = vset.pattern.permute.xlu0 0
    %156 = vperm.xlu0 %155, %v138
    %v157 = vpop.permute.xlu0 %156
    %v159 = vadd.f32 %v131, %v142
    %v160 = vadd.f32 %v132, %v147
    %v161 = vadd.f32 %v133, %v152
    %v162 = vadd.f32 %v134, %v157
    %163 = vst [vmem:[%s4] sm:$0xff] %v159
    %164 = vst [vmem:[%s4 + $0x8] sm:$0xff] %v160
    %165 = vst [vmem:[%s4 + $0x10] sm:$0xff] %v161
    %166 = vst [vmem:[%s4 + $0x18] sm:$0xff] %v162
    // Predicated region
    $region22: #{upconv3d_block.4} parent=1 // pred_check
      _
    $region23: #{upconv3d_block.4} parent=1 // pred_check_branch
      %168 = sbr.rel (0) target = $region25
    $region24: #{upconv3d_block.4} parent=1 // pred_region
      _
    $region25: #{upconv3d_block.4} parent=1 // pred_fallthru
      _
    // Predicated region
    $region26: #{upconv3d_block.4} parent=1 // pred_check
      _
    $region27: #{upconv3d_block.4} parent=1 // pred_check_branch
      %170 = sbr.rel (0) target = $region29
    $region28: #{upconv3d_block.4} parent=1 // pred_region
      _
    $region29: #{upconv3d_block.4} parent=1 // pred_fallthru
      _
    %171 = vsyncpa [#allocation3], 1

// kernel: upconv3d_block.5
$region0: #{upconv3d_block.5}
  #allocation0 [shape = 'u32[]', space=smem, size = 0x4, offset = 0x4, fixed_abs, tag = 'smem constant byte address 0x4 - core index']
  #allocation1 [shape = 'u32[144,128]{1,0:T(1,128)}', space=vmem, size = 0x12000, scoped, tag = 'internal scratch']
  %s0 = inlined_call_operand.vmem [shape: bf16[4,108], index: 0, kind: input, shape index: {}]
  %s1 = inlined_call_operand.vmem [shape: bf16[108,1024], index: 1, kind: input, shape index: {}]
  %s2 = inlined_call_operand.vmem [shape: bf16[4,108], index: 2, kind: input, shape index: {}]
  %s3 = inlined_call_operand.vmem [shape: bf16[108,1024], index: 3, kind: input, shape index: {}]
  %s4 = inlined_call_operand.vmem [shape: f32[4,1], index: 4, kind: input, shape index: {}]
  %s5 = inlined_call_operand.vmem [shape: f32[4,1], index: 5, kind: input, shape index: {}]
  %s6 = inlined_call_operand.vmem [shape: f32[4,1024], index: 6, kind: output, shape index: {}]
  %s7 = sld [smem:[#allocation0]]
  $region103: #{upconv3d_block.5} parent=0
    _
  %s9 = ssub.s32 1, %s7
  %s10 = scalar_select 0, %s9, %s7
  $region1: #{upconv3d_block.5} parent=0
    #allocation2 [shape = 'u8[229376]{0}', space=vmem, size = 0x38000, scoped, tag = 'input window, operand 1']
    #allocation3 [shape = 'u8[229376]{0}', space=vmem, size = 0x38000, scoped, tag = 'input window, operand 3']
    loop: start=0, step=1, limit=4
    $region2: #{upconv3d_block.5} parent=1 // loop_pre_header
      _
    $region3: #{upconv3d_block.5} parent=1 // loop_header
      %s12 = sphi 0, %s16
      %p13 = scmp.ge.s32.totalorder %s12, 4
      %s20 = sphi 0, %s20
      %s22 = sphi 0, %s20
      %s23 = sphi 0, %s22
      %s37 = sphi 0, %s23
      %s43 = sphi 0, %s45
      %s46 = sphi 0, %s43
      %s47 = sphi 0, %s46
      %s63 = sphi 0, %s47
      %s67 = sphi 0, %s67
      %s69 = sphi 0, %s67
      %s70 = sphi 0, %s69
      %s84 = sphi 0, %s70
      %s90 = sphi 0, %s92
      %s93 = sphi 0, %s90
      %s94 = sphi 0, %s93
      %s110 = sphi 0, %s94
      %s114 = sphi 0, %s114
      %s116 = sphi 0, %s114
      %s117 = sphi 0, %s116
      %s131 = sphi 0, %s117
      %s135 = sphi 0, %s135
      %s137 = sphi 0, %s135
      %s138 = sphi 0, %s137
      %s152 = sphi 0, %s138
      %s158 = sphi 0, %s160
      %s161 = sphi 0, %s158
      %s162 = sphi 0, %s161
      %s178 = sphi 0, %s162
    $region4: #{upconv3d_block.5} parent=1 // loop_header_branch
      %15 = sbr.rel (%p13) target = $region8
    $region5: #{upconv3d_block.5} parent=1 // loop_body
      %s17 = ssub.s32 %s12, 1
      %s18 = ssub.s32 %s12, 2
      %s19 = sadd.s32 %s12, 1
      %s21 = sadd.s32 %s20, 1
      %p24 = scmp.eq.s32.totalorder %s12, 1
      %p25 = scmp.ne.s32.totalorder %s20, %s22
      %p26 = scmp.eq.s32.totalorder %s12, 0
      %p27 = por %p25, %p26
      %p28 = scmp.ne.s32.totalorder %s20, %s22
      %p29 = scmp.eq.s32.totalorder %s17, 1
      %p30 = por %p28, %p29
      %p31 = scmp.ne.s32.totalorder %s22, %s23
      %p32 = scmp.eq.s32.totalorder %s17, 0
      %p33 = por %p31, %p32
      %p34 = scmp.ne.s32.totalorder %s22, %s23
      %p35 = scmp.eq.s32.totalorder %s18, 1
      %p36 = por %p34, %p35
      %p38 = scmp.ne.s32.totalorder %s23, %s37
      %p39 = scmp.eq.s32.totalorder %s18, 0
      %p40 = por %p38, %p39
      %s41 = ssub.s32 %s12, %s19
      %p42 = scmp.eq.s32.totalorder %s41, 0
      %s44 = sadd.s32 %s43, 1
      %s45 = scalar_select %p42, %s43, %s44
      %p48 = pneg %p42
      %p49 = scmp.eq.s32.totalorder %s12, 1
      %p50 = por %p48, %p49
      %p51 = scmp.ne.s32.totalorder %s43, %s46
      %p52 = scmp.eq.s32.totalorder %s12, 0
      %p53 = por %p51, %p52
      %p54 = scmp.ne.s32.totalorder %s43, %s46
      %p55 = scmp.eq.s32.totalorder %s17, 1
      %p56 = por %p54, %p55
      %p57 = scmp.ne.s32.totalorder %s46, %s47
      %p58 = scmp.eq.s32.totalorder %s17, 0
      %p59 = por %p57, %p58
      %p60 = scmp.ne.s32.totalorder %s46, %s47
      %p61 = scmp.eq.s32.totalorder %s18, 1
      %p62 = por %p60, %p61
      %p64 = scmp.ne.s32.totalorder %s47, %s63
      %p65 = scmp.eq.s32.totalorder %s18, 0
      %p66 = por %p64, %p65
      %s68 = sadd.s32 %s67, 1
      %p71 = scmp.eq.s32.totalorder %s12, 1
      %p72 = scmp.ne.s32.totalorder %s67, %s69
      %p73 = scmp.eq.s32.totalorder %s12, 0
      %p74 = por %p72, %p73
      %p75 = scmp.ne.s32.totalorder %s67, %s69
      %p76 = scmp.eq.s32.totalorder %s17, 1
      %p77 = por %p75, %p76
      %p78 = scmp.ne.s32.totalorder %s69, %s70
      %p79 = scmp.eq.s32.totalorder %s17, 0
      %p80 = por %p78, %p79
      %p81 = scmp.ne.s32.totalorder %s69, %s70
      %p82 = scmp.eq.s32.totalorder %s18, 1
      %p83 = por %p81, %p82
      %p85 = scmp.ne.s32.totalorder %s70, %s84
      %p86 = scmp.eq.s32.totalorder %s18, 0
      %p87 = por %p85, %p86
      %s88 = ssub.s32 %s12, %s19
      %p89 = scmp.eq.s32.totalorder %s88, 0
      %s91 = sadd.s32 %s90, 1
      %s92 = scalar_select %p89, %s90, %s91
      %p95 = pneg %p89
      %p96 = scmp.eq.s32.totalorder %s12, 1
      %p97 = por %p95, %p96
      %p98 = scmp.ne.s32.totalorder %s90, %s93
      %p99 = scmp.eq.s32.totalorder %s12, 0
      %p100 = por %p98, %p99
      %p101 = scmp.ne.s32.totalorder %s90, %s93
      %p102 = scmp.eq.s32.totalorder %s17, 1
      %p103 = por %p101, %p102
      %p104 = scmp.ne.s32.totalorder %s93, %s94
      %p105 = scmp.eq.s32.totalorder %s17, 0
      %p106 = por %p104, %p105
      %p107 = scmp.ne.s32.totalorder %s93, %s94
      %p108 = scmp.eq.s32.totalorder %s18, 1
      %p109 = por %p107, %p108
      %p111 = scmp.ne.s32.totalorder %s94, %s110
      %p112 = scmp.eq.s32.totalorder %s18, 0
      %p113 = por %p111, %p112
      %s115 = sadd.s32 %s114, 1
      %p118 = scmp.eq.s32.totalorder %s12, 1
      %p119 = scmp.ne.s32.totalorder %s114, %s116
      %p120 = scmp.eq.s32.totalorder %s12, 0
      %p121 = por %p119, %p120
      %p122 = scmp.ne.s32.totalorder %s114, %s116
      %p123 = scmp.eq.s32.totalorder %s17, 1
      %p124 = por %p122, %p123
      %p125 = scmp.ne.s32.totalorder %s116, %s117
      %p126 = scmp.eq.s32.totalorder %s17, 0
      %p127 = por %p125, %p126
      %p128 = scmp.ne.s32.totalorder %s116, %s117
      %p129 = scmp.eq.s32.totalorder %s18, 1
      %p130 = por %p128, %p129
      %p132 = scmp.ne.s32.totalorder %s117, %s131
      %p133 = scmp.eq.s32.totalorder %s18, 0
      %p134 = por %p132, %p133
      %s136 = sadd.s32 %s135, 1
      %p139 = scmp.eq.s32.totalorder %s12, 1
      %p140 = scmp.ne.s32.totalorder %s135, %s137
      %p141 = scmp.eq.s32.totalorder %s12, 0
      %p142 = por %p140, %p141
      %p143 = scmp.ne.s32.totalorder %s135, %s137
      %p144 = scmp.eq.s32.totalorder %s17, 1
      %p145 = por %p143, %p144
      %p146 = scmp.ne.s32.totalorder %s137, %s138
      %p147 = scmp.eq.s32.totalorder %s17, 0
      %p148 = por %p146, %p147
      %p149 = scmp.ne.s32.totalorder %s137, %s138
      %p150 = scmp.eq.s32.totalorder %s18, 1
      %p151 = por %p149, %p150
      %p153 = scmp.ne.s32.totalorder %s138, %s152
      %p154 = scmp.eq.s32.totalorder %s18, 0
      %p155 = por %p153, %p154
      %s156 = ssub.s32 %s12, %s19
      %p157 = scmp.eq.s32.totalorder %s156, 0
      %s159 = sadd.s32 %s158, 1
      %s160 = scalar_select %p157, %s158, %s159
      %p163 = pneg %p157
      %p164 = scmp.eq.s32.totalorder %s12, 1
      %p165 = por %p163, %p164
      %p166 = scmp.ne.s32.totalorder %s158, %s161
      %p167 = scmp.eq.s32.totalorder %s12, 0
      %p168 = por %p166, %p167
      %p169 = scmp.ne.s32.totalorder %s158, %s161
      %p170 = scmp.eq.s32.totalorder %s17, 1
      %p171 = por %p169, %p170
      %p172 = scmp.ne.s32.totalorder %s161, %s162
      %p173 = scmp.eq.s32.totalorder %s17, 0
      %p174 = por %p172, %p173
      %p175 = scmp.ne.s32.totalorder %s161, %s162
      %p176 = scmp.eq.s32.totalorder %s18, 1
      %p177 = por %p175, %p176
      %p179 = scmp.ne.s32.totalorder %s162, %s178
      %p180 = scmp.eq.s32.totalorder %s18, 0
      %p181 = por %p179, %p180
      %p182 = scmp.le.s32.totalorder 1, %s12
      %p183 = scmp.lt.s32.totalorder %s12, 3
      %p184 = pnand %p182, %p183
      %p185 = pneg %p184
      // Predicated region
      $region9: #{upconv3d_block.5} parent=5 // pred_check
        _
      $region10: #{upconv3d_block.5} parent=5 // pred_check_branch
        %187 = sbr.rel (%p184) target = $region12
      $region11: #{upconv3d_block.5} parent=5 // pred_region
        %s188 = ssub.s32 %s12, 1
        // Predicated region
        $region13: #{upconv3d_block.5} parent=11 // pred_check
          %p189 = pneg %p33
        $region14: #{upconv3d_block.5} parent=11 // pred_check_branch
          %191 = sbr.rel (%p189) target = $region16
        $region15: #{upconv3d_block.5} parent=11 // pred_region
          _
        $region16: #{upconv3d_block.5} parent=11 // pred_fallthru
          _
        // Predicated region
        $region17: #{upconv3d_block.5} parent=11 // pred_check
          %p192 = pneg %p80
        $region18: #{upconv3d_block.5} parent=11 // pred_check_branch
          %194 = sbr.rel (%p192) target = $region20
        $region19: #{upconv3d_block.5} parent=11 // pred_region
          _
        $region20: #{upconv3d_block.5} parent=11 // pred_fallthru
          _
        // Predicated region
        $region21: #{upconv3d_block.5} parent=11 // pred_check
          %p195 = pneg %p127
        $region22: #{upconv3d_block.5} parent=11 // pred_check_branch
          %197 = sbr.rel (%p195) target = $region24
        $region23: #{upconv3d_block.5} parent=11 // pred_region
          _
        $region24: #{upconv3d_block.5} parent=11 // pred_fallthru
          _
        // Predicated region
        $region25: #{upconv3d_block.5} parent=11 // pred_check
          %p198 = pneg %p148
        $region26: #{upconv3d_block.5} parent=11 // pred_check_branch
          %200 = sbr.rel (%p198) target = $region28
        $region27: #{upconv3d_block.5} parent=11 // pred_region
          _
        $region28: #{upconv3d_block.5} parent=11 // pred_fallthru
          _
      $region12: #{upconv3d_block.5} parent=5 // pred_fallthru
        _
      %p201 = scmp.lt.s32.totalorder %s12, 2
      // Predicated region
      $region29: #{upconv3d_block.5} parent=5 // pred_check
        %p202 = pneg %p201
      $region30: #{upconv3d_block.5} parent=5 // pred_check_branch
        %204 = sbr.rel (%p202) target = $region32
      $region31: #{upconv3d_block.5} parent=5 // pred_region
        // Predicated region
        $region33: #{upconv3d_block.5} parent=31 // pred_check
          %p205 = pneg %p53
        $region34: #{upconv3d_block.5} parent=31 // pred_check_branch
          %207 = sbr.rel (%p205) target = $region36
        $region35: #{upconv3d_block.5} parent=31 // pred_region
          %s208 = sand.u32 %s43, 1
          %s209 = sand.u32 %s43, 1
          %s210 = smul.addr %s209, 224
          %s211 = scalar_lea.vmem [#allocation2], %s210
          %s212 = smul.u32 4, %s12
          %s213 = smul.addr %s212, 4
          %s214 = scalar_lea.vmem %s1, %s213
          // Predicated region
          $region37: #{upconv3d_block.5} parent=35 // pred_check
            _
          $region38: #{upconv3d_block.5} parent=35 // pred_check_branch
            %216 = sbr.rel (0) target = $region40
          $region39: #{upconv3d_block.5} parent=35 // pred_region
            // Predicated region
            $region41: #{upconv3d_block.5} parent=39 // pred_check
              _
            $region42: #{upconv3d_block.5} parent=39 // pred_check_branch
              %218 = sbr.rel (0) target = $region44
            $region43: #{upconv3d_block.5} parent=39 // pred_region
              loop: start=0, step=1, limit=1
              $region45: #{upconv3d_block.5} parent=43 // loop_pre_header
                _
              $region46: #{upconv3d_block.5} parent=43 // loop_header
                %s220 = sphi 0, %s224
                %p221 = scmp.ge.s32.totalorder %s220, 1
                %s225 = sphi %s214, %s214
                %s226 = sphi %s211, %s211
              $region47: #{upconv3d_block.5} parent=43 // loop_header_branch
                %223 = sbr.rel (%p221) target = $region51
              $region48: #{upconv3d_block.5} parent=43 // loop_body
                %v227 = vld [vmem:[%s225] sm:$0xff]
                %228 = vst [vmem:[%s226] sm:$0xff] %v227
                %v229 = vld [vmem:[%s225 + $0x8] sm:$0xff]
                %230 = vst [vmem:[%s226 + $0x8] sm:$0xff] %v229
                %v231 = vld [vmem:[%s225 + $0x20] sm:$0xff]
                %232 = vst [vmem:[%s226 + $0x10] sm:$0xff] %v231
                %v233 = vld [vmem:[%s225 + $0x28] sm:$0xff]
                %234 = vst [vmem:[%s226 + $0x18] sm:$0xff] %v233
                %v235 = vld [vmem:[%s225 + $0x40] sm:$0xff]
                %236 = vst [vmem:[%s226 + $0x20] sm:$0xff] %v235
                %v237 = vld [vmem:[%s225 + $0x48] sm:$0xff]
                %238 = vst [vmem:[%s226 + $0x28] sm:$0xff] %v237
                %v239 = vld [vmem:[%s225 + $0x60] sm:$0xff]
                %240 = vst [vmem:[%s226 + $0x30] sm:$0xff] %v239
                %v241 = vld [vmem:[%s225 + $0x68] sm:$0xff]
                %242 = vst [vmem:[%s226 + $0x38] sm:$0xff] %v241
                %v243 = vld [vmem:[%s225 + $0x80] sm:$0xff]
                %244 = vst [vmem:[%s226 + $0x40] sm:$0xff] %v243
                %v245 = vld [vmem:[%s225 + $0x88] sm:$0xff]
                %246 = vst [vmem:[%s226 + $0x48] sm:$0xff] %v245
                %v247 = vld [vmem:[%s225 + $0xa0] sm:$0xff]
                %248 = vst [vmem:[%s226 + $0x50] sm:$0xff] %v247
                %v249 = vld [vmem:[%s225 + $0xa8] sm:$0xff]
                %250 = vst [vmem:[%s226 + $0x58] sm:$0xff] %v249
                %v251 = vld [vmem:[%s225 + $0xc0] sm:$0xff]
                %252 = vst [vmem:[%s226 + $0x60] sm:$0xff] %v251
                %v253 = vld [vmem:[%s225 + $0xc8] sm:$0xff]
                %254 = vst [vmem:[%s226 + $0x68] sm:$0xff] %v253
                %v255 = vld [vmem:[%s225 + $0xe0] sm:$0xff]
                %256 = vst [vmem:[%s226 + $0x70] sm:$0xff] %v255
                %v257 = vld [vmem:[%s225 + $0xe8] sm:$0xff]
                %258 = vst [vmem:[%s226 + $0x78] sm:$0xff] %v257
                %v259 = vld [vmem:[%s225 + $0x100] sm:$0xff]
                %260 = vst [vmem:[%s226 + $0x80] sm:$0xff] %v259
                %v261 = vld [vmem:[%s225 + $0x108] sm:$0xff]
                %262 = vst [vmem:[%s226 + $0x88] sm:$0xff] %v261
                %v263 = vld [vmem:[%s225 + $0x120] sm:$0xff]
                %264 = vst [vmem:[%s226 + $0x90] sm:$0xff] %v263
                %v265 = vld [vmem:[%s225 + $0x128] sm:$0xff]
                %266 = vst [vmem:[%s226 + $0x98] sm:$0xff] %v265
                %v267 = vld [vmem:[%s225 + $0x140] sm:$0xff]
                %268 = vst [vmem:[%s226 + $0xa0] sm:$0xff] %v267
                %v269 = vld [vmem:[%s225 + $0x148] sm:$0xff]
                %270 = vst [vmem:[%s226 + $0xa8] sm:$0xff] %v269
                %v271 = vld [vmem:[%s225 + $0x160] sm:$0xff]
                %272 = vst [vmem:[%s226 + $0xb0] sm:$0xff] %v271
                %v273 = vld [vmem:[%s225 + $0x168] sm:$0xff]
                %274 = vst [vmem:[%s226 + $0xb8] sm:$0xff] %v273
                %v275 = vld [vmem:[%s225 + $0x180] sm:$0xff]
                %276 = vst [vmem:[%s226 + $0xc0] sm:$0xff] %v275
                %v277 = vld [vmem:[%s225 + $0x188] sm:$0xff]
                %278 = vst [vmem:[%s226 + $0xc8] sm:$0xff] %v277
                %v279 = vld [vmem:[%s225 + $0x1a0] sm:$0xff]
                %280 = vst [vmem:[%s226 + $0xd0] sm:$0xff] %v279
                %v281 = vld [vmem:[%s225 + $0x1a8] sm:$0xff]
                %282 = vst [vmem:[%s226 + $0xd8] sm:$0xff] %v281
              $region49: #{upconv3d_block.5} parent=43 // loop_footer
                %s224 = sadd.s32 1, %s220
              $region50: #{upconv3d_block.5} parent=43 // loop_footer_branch
                %219 = sbr.rel target = $region46
              $region51: #{upconv3d_block.5} parent=43 // loop_exit
                _
            $region44: #{upconv3d_block.5} parent=39 // pred_fallthru
              _
            // Predicated region
            $region52: #{upconv3d_block.5} parent=39 // pred_check
              _
            $region53: #{upconv3d_block.5} parent=39 // pred_check_branch
              %284 = sbr.rel target = $region55
            $region54: #{upconv3d_block.5} parent=39 // pred_region
              _
            $region55: #{upconv3d_block.5} parent=39 // pred_fallthru
              _
          $region40: #{upconv3d_block.5} parent=35 // pred_fallthru
            _
          %285 = vnop
        $region36: #{upconv3d_block.5} parent=31 // pred_fallthru
          _
        // Predicated region
        $region56: #{upconv3d_block.5} parent=31 // pred_check
          %p286 = pneg %p100
        $region57: #{upconv3d_block.5} parent=31 // pred_check_branch
          %288 = sbr.rel (%p286) target = $region59
        $region58: #{upconv3d_block.5} parent=31 // pred_region
          %s289 = sand.u32 %s90, 1
          %s290 = sand.u32 %s90, 1
          %s291 = smul.addr %s290, 224
          %s292 = scalar_lea.vmem [#allocation3], %s291
          %s293 = smul.u32 4, %s12
          %s294 = smul.addr %s293, 4
          %s295 = scalar_lea.vmem %s3, %s294
          // Predicated region
          $region60: #{upconv3d_block.5} parent=58 // pred_check
            _
          $region61: #{upconv3d_block.5} parent=58 // pred_check_branch
            %297 = sbr.rel (0) target = $region63
          $region62: #{upconv3d_block.5} parent=58 // pred_region
            // Predicated region
            $region64: #{upconv3d_block.5} parent=62 // pred_check
              _
            $region65: #{upconv3d_block.5} parent=62 // pred_check_branch
              %299 = sbr.rel (0) target = $region67
            $region66: #{upconv3d_block.5} parent=62 // pred_region
              loop: start=0, step=1, limit=1
              $region68: #{upconv3d_block.5} parent=66 // loop_pre_header
                _
              $region69: #{upconv3d_block.5} parent=66 // loop_header
                %s301 = sphi 0, %s305
                %p302 = scmp.ge.s32.totalorder %s301, 1
                %s306 = sphi %s295, %s295
                %s307 = sphi %s292, %s292
              $region70: #{upconv3d_block.5} parent=66 // loop_header_branch
                %304 = sbr.rel (%p302) target = $region74
              $region71: #{upconv3d_block.5} parent=66 // loop_body
                %v308 = vld [vmem:[%s306] sm:$0xff]
                %309 = vst [vmem:[%s307] sm:$0xff] %v308
                %v310 = vld [vmem:[%s306 + $0x8] sm:$0xff]
                %311 = vst [vmem:[%s307 + $0x8] sm:$0xff] %v310
                %v312 = vld [vmem:[%s306 + $0x20] sm:$0xff]
                %313 = vst [vmem:[%s307 + $0x10] sm:$0xff] %v312
                %v314 = vld [vmem:[%s306 + $0x28] sm:$0xff]
                %315 = vst [vmem:[%s307 + $0x18] sm:$0xff] %v314
                %v316 = vld [vmem:[%s306 + $0x40] sm:$0xff]
                %317 = vst [vmem:[%s307 + $0x20] sm:$0xff] %v316
                %v318 = vld [vmem:[%s306 + $0x48] sm:$0xff]
                %319 = vst [vmem:[%s307 + $0x28] sm:$0xff] %v318
                %v320 = vld [vmem:[%s306 + $0x60] sm:$0xff]
                %321 = vst [vmem:[%s307 + $0x30] sm:$0xff] %v320
                %v322 = vld [vmem:[%s306 + $0x68] sm:$0xff]
                %323 = vst [vmem:[%s307 + $0x38] sm:$0xff] %v322
                %v324 = vld [vmem:[%s306 + $0x80] sm:$0xff]
                %325 = vst [vmem:[%s307 + $0x40] sm:$0xff] %v324
                %v326 = vld [vmem:[%s306 + $0x88] sm:$0xff]
                %327 = vst [vmem:[%s307 + $0x48] sm:$0xff] %v326
                %v328 = vld [vmem:[%s306 + $0xa0] sm:$0xff]
                %329 = vst [vmem:[%s307 + $0x50] sm:$0xff] %v328
                %v330 = vld [vmem:[%s306 + $0xa8] sm:$0xff]
                %331 = vst [vmem:[%s307 + $0x58] sm:$0xff] %v330
                %v332 = vld [vmem:[%s306 + $0xc0] sm:$0xff]
                %333 = vst [vmem:[%s307 + $0x60] sm:$0xff] %v332
                %v334 = vld [vmem:[%s306 + $0xc8] sm:$0xff]
                %335 = vst [vmem:[%s307 + $0x68] sm:$0xff] %v334
                %v336 = vld [vmem:[%s306 + $0xe0] sm:$0xff]
                %337 = vst [vmem:[%s307 + $0x70] sm:$0xff] %v336
                %v338 = vld [vmem:[%s306 + $0xe8] sm:$0xff]
                %339 = vst [vmem:[%s307 + $0x78] sm:$0xff] %v338
                %v340 = vld [vmem:[%s306 + $0x100] sm:$0xff]
                %341 = vst [vmem:[%s307 + $0x80] sm:$0xff] %v340
                %v342 = vld [vmem:[%s306 + $0x108] sm:$0xff]
                %343 = vst [vmem:[%s307 + $0x88] sm:$0xff] %v342
                %v344 = vld [vmem:[%s306 + $0x120] sm:$0xff]
                %345 = vst [vmem:[%s307 + $0x90] sm:$0xff] %v344
                %v346 = vld [vmem:[%s306 + $0x128] sm:$0xff]
                %347 = vst [vmem:[%s307 + $0x98] sm:$0xff] %v346
                %v348 = vld [vmem:[%s306 + $0x140] sm:$0xff]
                %349 = vst [vmem:[%s307 + $0xa0] sm:$0xff] %v348
                %v350 = vld [vmem:[%s306 + $0x148] sm:$0xff]
                %351 = vst [vmem:[%s307 + $0xa8] sm:$0xff] %v350
                %v352 = vld [vmem:[%s306 + $0x160] sm:$0xff]
                %353 = vst [vmem:[%s307 + $0xb0] sm:$0xff] %v352
                %v354 = vld [vmem:[%s306 + $0x168] sm:$0xff]
                %355 = vst [vmem:[%s307 + $0xb8] sm:$0xff] %v354
                %v356 = vld [vmem:[%s306 + $0x180] sm:$0xff]
                %357 = vst [vmem:[%s307 + $0xc0] sm:$0xff] %v356
                %v358 = vld [vmem:[%s306 + $0x188] sm:$0xff]
                %359 = vst [vmem:[%s307 + $0xc8] sm:$0xff] %v358
                %v360 = vld [vmem:[%s306 + $0x1a0] sm:$0xff]
                %361 = vst [vmem:[%s307 + $0xd0] sm:$0xff] %v360
                %v362 = vld [vmem:[%s306 + $0x1a8] sm:$0xff]
                %363 = vst [vmem:[%s307 + $0xd8] sm:$0xff] %v362
              $region72: #{upconv3d_block.5} parent=66 // loop_footer
                %s305 = sadd.s32 1, %s301
              $region73: #{upconv3d_block.5} parent=66 // loop_footer_branch
                %300 = sbr.rel target = $region69
              $region74: #{upconv3d_block.5} parent=66 // loop_exit
                _
            $region67: #{upconv3d_block.5} parent=62 // pred_fallthru
              _
            // Predicated region
            $region75: #{upconv3d_block.5} parent=62 // pred_check
              _
            $region76: #{upconv3d_block.5} parent=62 // pred_check_branch
              %365 = sbr.rel target = $region78
            $region77: #{upconv3d_block.5} parent=62 // pred_region
              _
            $region78: #{upconv3d_block.5} parent=62 // pred_fallthru
              _
          $region63: #{upconv3d_block.5} parent=58 // pred_fallthru
            _
          %366 = vnop
        $region59: #{upconv3d_block.5} parent=31 // pred_fallthru
          _
      $region32: #{upconv3d_block.5} parent=5 // pred_fallthru
        _
      %p367 = scmp.le.s32.totalorder 1, %s12
      %p368 = scmp.lt.s32.totalorder %s12, 3
      %p369 = pnand %p367, %p368
      %p370 = pneg %p369
      // Predicated region
      $region79: #{upconv3d_block.5} parent=5 // pred_check
        _
      $region80: #{upconv3d_block.5} parent=5 // pred_check_branch
        %372 = sbr.rel (%p369) target = $region82
      $region81: #{upconv3d_block.5} parent=5 // pred_region
        %s373 = ssub.s32 %s12, 1
        %s374 = sand.u32 %s46, 1
        %s375 = sand.u32 %s46, 1
        %s376 = smul.addr %s375, 224
        %s377 = scalar_lea.vmem [#allocation2], %s376
        // Predicated region
        $region83: #{upconv3d_block.5} parent=81 // pred_check
          %p378 = pneg %p59
        $region84: #{upconv3d_block.5} parent=81 // pred_check_branch
          %380 = sbr.rel (%p378) target = $region86
        $region85: #{upconv3d_block.5} parent=81 // pred_region
          _
        $region86: #{upconv3d_block.5} parent=81 // pred_fallthru
          _
        %s381 = sand.u32 %s93, 1
        %s382 = sand.u32 %s93, 1
        %s383 = smul.addr %s382, 224
        %s384 = scalar_lea.vmem [#allocation3], %s383
        // Predicated region
        $region87: #{upconv3d_block.5} parent=81 // pred_check
          %p385 = pneg %p106
        $region88: #{upconv3d_block.5} parent=81 // pred_check_branch
          %387 = sbr.rel (%p385) target = $region90
        $region89: #{upconv3d_block.5} parent=81 // pred_region
          _
        $region90: #{upconv3d_block.5} parent=81 // pred_fallthru
          _
        %p388 = pneg %p33
        %p389 = pneg %p30
        %s390 = sand.u32 %s46, 1
        %s391 = sand.u32 %s46, 1
        %s392 = smul.addr %s391, 224
        %s393 = scalar_lea.vmem [#allocation2], %s392
        %p394 = pneg %p59
        %p395 = pneg %p56
        %p396 = pneg %p80
        %p397 = pneg %p77
        %s398 = sand.u32 %s93, 1
        %s399 = sand.u32 %s93, 1
        %s400 = smul.addr %s399, 224
        %s401 = scalar_lea.vmem [#allocation3], %s400
        %p402 = pneg %p106
        %p403 = pneg %p103
        %p404 = pneg %p127
        %p405 = pneg %p124
        %p406 = pneg %p148
        %p407 = pneg %p145
        %p408 = pneg %p174
        %p409 = pneg %p171
        %s410 = smul.u32 4, %s17
        %p411 = scmp.lt.s32.totalorder %s410, 7
        %s412 = scalar_select %p411, %s410, 7
        %s413 = smul.addr %s412, 4
        %s414 = scalar_lea.vmem %s6, %s413
        %s415 = smul.u32 4, %s17
        %s416 = smul.u32 4, %s17
        %s417 = smul.u32 4, %s17
        %p418 = scmp.lt.s32.totalorder %s417, 7
        %s419 = scalar_select %p418, %s417, 7
        %s420 = smul.addr %s419, 4
        %s421 = scalar_lea.vmem %s6, %s420
        %s422 = smul.u32 4, %s17
        %v424 = vld [vmem:[%s0] sm:$0x3]
        %v425 = vld [vmem:[%s377] sm:$0xff]
        %v426 = vld [vmem:[%s377 + $0x8] sm:$0xff]
        %v427 = vld [vmem:[%s377 + $0x10] sm:$0xff]
        %v428 = vld [vmem:[%s377 + $0x18] sm:$0xff]
        %v429 = vld [vmem:[%s377 + $0x20] sm:$0xff]
        %v430 = vld [vmem:[%s377 + $0x28] sm:$0xff]
        %v431 = vld [vmem:[%s377 + $0x30] sm:$0xff]
        %v432 = vld [vmem:[%s377 + $0x38] sm:$0xff]
        %v433 = vld [vmem:[%s377 + $0x40] sm:$0xff]
        %v434 = vld [vmem:[%s377 + $0x48] sm:$0xff]
        %v435 = vld [vmem:[%s377 + $0x50] sm:$0xff]
        %v436 = vld [vmem:[%s377 + $0x58] sm:$0xff]
        %v437 = vld [vmem:[%s377 + $0x60] sm:$0xff]
        %v438 = vld [vmem:[%s377 + $0x68] sm:$0xff]
        %v439 = vld [vmem:[%s377 + $0x70] sm:$0xff]
        %v440 = vld [vmem:[%s377 + $0x78] sm:$0xff]
        %v441 = vld [vmem:[%s377 + $0x80] sm:$0xff]
        %v442 = vld [vmem:[%s377 + $0x88] sm:$0xff]
        %v443 = vld [vmem:[%s377 + $0x90] sm:$0xff]
        %v444 = vld [vmem:[%s377 + $0x98] sm:$0xff]
        %v445 = vld [vmem:[%s377 + $0xa0] sm:$0xff]
        %v446 = vld [vmem:[%s377 + $0xa8] sm:$0xff]
        %v447 = vld [vmem:[%s377 + $0xb0] sm:$0xff]
        %v448 = vld [vmem:[%s377 + $0xb8] sm:$0xff]
        %v449 = vld [vmem:[%s377 + $0xc0] sm:$0xff]
        %v450 = vld [vmem:[%s377 + $0xc8] sm:$0xff]
        %v451 = vld [vmem:[%s377 + $0xd0] sm:$0x33]
        %v452 = vld [vmem:[%s377 + $0xd8] sm:$0x33]
        %v453 = vld [vmem:[%s2] sm:$0x3]
        %v454 = vld [vmem:[%s384] sm:$0xff]
        %v455 = vld [vmem:[%s384 + $0x8] sm:$0xff]
        %v456 = vld [vmem:[%s384 + $0x10] sm:$0xff]
        %v457 = vld [vmem:[%s384 + $0x18] sm:$0xff]
        %v458 = vld [vmem:[%s384 + $0x20] sm:$0xff]
        %v459 = vld [vmem:[%s384 + $0x28] sm:$0xff]
        %v460 = vld [vmem:[%s384 + $0x30] sm:$0xff]
        %v461 = vld [vmem:[%s384 + $0x38] sm:$0xff]
        %v462 = vld [vmem:[%s384 + $0x40] sm:$0xff]
        %v463 = vld [vmem:[%s384 + $0x48] sm:$0xff]
        %v464 = vld [vmem:[%s384 + $0x50] sm:$0xff]
        %v465 = vld [vmem:[%s384 + $0x58] sm:$0xff]
        %v466 = vld [vmem:[%s384 + $0x60] sm:$0xff]
        %v467 = vld [vmem:[%s384 + $0x68] sm:$0xff]
        %v468 = vld [vmem:[%s384 + $0x70] sm:$0xff]
        %v469 = vld [vmem:[%s384 + $0x78] sm:$0xff]
        %v470 = vld [vmem:[%s384 + $0x80] sm:$0xff]
        %v471 = vld [vmem:[%s384 + $0x88] sm:$0xff]
        %v472 = vld [vmem:[%s384 + $0x90] sm:$0xff]
        %v473 = vld [vmem:[%s384 + $0x98] sm:$0xff]
        %v474 = vld [vmem:[%s384 + $0xa0] sm:$0xff]
        %v475 = vld [vmem:[%s384 + $0xa8] sm:$0xff]
        %v476 = vld [vmem:[%s384 + $0xb0] sm:$0xff]
        %v477 = vld [vmem:[%s384 + $0xb8] sm:$0xff]
        %v478 = vld [vmem:[%s384 + $0xc0] sm:$0xff]
        %v479 = vld [vmem:[%s384 + $0xc8] sm:$0xff]
        %v480 = vld [vmem:[%s384 + $0xd0] sm:$0x33]
        %v481 = vld [vmem:[%s384 + $0xd8] sm:$0x33]
        %v510 = vunpack.c.l.b16 %v454
        %v511 = vunpack.c.h.b16 %v454
        %v512 = vunpack.c.l.b16 %v455
        %v513 = vunpack.c.h.b16 %v455
        %v514 = vunpack.c.l.b16 %v456
        %v515 = vunpack.c.h.b16 %v456
        %v516 = vunpack.c.l.b16 %v457
        %v517 = vunpack.c.h.b16 %v457
        %v518 = vunpack.c.l.b16 %v458
        %v519 = vunpack.c.h.b16 %v458
        %v520 = vunpack.c.l.b16 %v459
        %v521 = vunpack.c.h.b16 %v459
        %v522 = vunpack.c.l.b16 %v460
        %v523 = vunpack.c.h.b16 %v460
        %v524 = vunpack.c.l.b16 %v461
        %v525 = vunpack.c.h.b16 %v461
        %v526 = vunpack.c.l.b16 %v462
        %v527 = vunpack.c.h.b16 %v462
        %v528 = vunpack.c.l.b16 %v463
        %v529 = vunpack.c.h.b16 %v463
        %v530 = vunpack.c.l.b16 %v464
        %v531 = vunpack.c.h.b16 %v464
        %v532 = vunpack.c.l.b16 %v465
        %v533 = vunpack.c.h.b16 %v465
        %v534 = vunpack.c.l.b16 %v466
        %v535 = vunpack.c.h.b16 %v466
        %v536 = vunpack.c.l.b16 %v467
        %v537 = vunpack.c.h.b16 %v467
        %v538 = vunpack.c.l.b16 %v468
        %v539 = vunpack.c.h.b16 %v468
        %v540 = vunpack.c.l.b16 %v469
        %v541 = vunpack.c.h.b16 %v469
        %v542 = vunpack.c.l.b16 %v470
        %v543 = vunpack.c.h.b16 %v470
        %v544 = vunpack.c.l.b16 %v471
        %v545 = vunpack.c.h.b16 %v471
        %v546 = vunpack.c.l.b16 %v472
        %v547 = vunpack.c.h.b16 %v472
        %v548 = vunpack.c.l.b16 %v473
        %v549 = vunpack.c.h.b16 %v473
        %v550 = vunpack.c.l.b16 %v474
        %v551 = vunpack.c.h.b16 %v474
        %v552 = vunpack.c.l.b16 %v475
        %v553 = vunpack.c.h.b16 %v475
        %v554 = vunpack.c.l.b16 %v476
        %v555 = vunpack.c.h.b16 %v476
        %v556 = vunpack.c.l.b16 %v477
        %v557 = vunpack.c.h.b16 %v477
        %v558 = vunpack.c.l.b16 %v478
        %v559 = vunpack.c.h.b16 %v478
        %v560 = vunpack.c.l.b16 %v479
        %v561 = vunpack.c.h.b16 %v479
        %v562 = vunpack.c.l.b16 %v480
        %v563 = vunpack.c.h.b16 %v480
        %v564 = vunpack.c.l.b16 %v481
        %v565 = vunpack.c.h.b16 %v481
        %v566 = vpack.c.b16 %v514, %v510
        %v567 = vpack.c.b16 %v515, %v511
        %v568 = vpack.c.b16 %v516, %v512
        %v569 = vpack.c.b16 %v517, %v513
        %v570 = vpack.c.b16 %v522, %v518
        %v571 = vpack.c.b16 %v523, %v519
        %v572 = vpack.c.b16 %v524, %v520
        %v573 = vpack.c.b16 %v525, %v521
        %v574 = vpack.c.b16 %v530, %v526
        %v575 = vpack.c.b16 %v531, %v527
        %v576 = vpack.c.b16 %v532, %v528
        %v577 = vpack.c.b16 %v533, %v529
        %v578 = vpack.c.b16 %v538, %v534
        %v579 = vpack.c.b16 %v539, %v535
        %v580 = vpack.c.b16 %v540, %v536
        %v581 = vpack.c.b16 %v541, %v537
        %v582 = vpack.c.b16 %v546, %v542
        %v583 = vpack.c.b16 %v547, %v543
        %v584 = vpack.c.b16 %v548, %v544
        %v585 = vpack.c.b16 %v549, %v545
        %v586 = vpack.c.b16 %v554, %v550
        %v587 = vpack.c.b16 %v555, %v551
        %v588 = vpack.c.b16 %v556, %v552
        %v589 = vpack.c.b16 %v557, %v553
        %v590 = vpack.c.b16 %v562, %v558
        %v591 = vpack.c.b16 %v563, %v559
        %v592 = vpack.c.b16 %v564, %v560
        %v593 = vpack.c.b16 %v565, %v561
        %vm618 = vcmask 883712
        %v620 = vsel %vm618, %v453, 0
        %vm622 = vcmask 1045504
        %v624 = vsel %vm622, %v590, 0
        %v627 = vsel %vm622, %v591, 0
        %v630 = vsel %vm622, %v592, 0
        %v633 = vsel %vm622, %v593, 0
        %635 = vmatprep.subr.bf16.mxu0 %v567
        %636 = vmatpush1.bf16.msra.mxu0 %v566
        %637 = vmatprep.subr.bf16.mxu0 %v571
        %638 = vmatpush1.bf16.msra.mxu0 %v570
        %639 = vmatprep.subr.bf16.mxu0 %v575
        %640 = vmatpush1.bf16.msra.mxu0 %v574
        %641 = vmatprep.subr.bf16.mxu0 %v579
        %642 = vmatpush1.bf16.msra.mxu0 %v578
        %643 = vmatprep.subr.bf16.mxu0 %v583
        %644 = vmatpush1.bf16.msra.mxu0 %v582
        %645 = vmatprep.subr.bf16.mxu0 %v587
        %646 = vmatpush1.bf16.msra.mxu0 %v586
        %647 = vmatprep.subr.bf16.mxu0 %v627
        %648 = vmatpush1.bf16.msra.mxu0 %v624
        %649 = vmatprep.subr.bf16.mxu0 0
        %650 = vmatpush1.bf16.msra.mxu0 0
        %651 = vmatprep.subr.bf16.mxu0 0
        %652 = vmatpush1.bf16.msra.mxu0 0
        %653 = vmatprep.subr.bf16.mxu0 0
        %654 = vmatpush1.bf16.msra.mxu0 0
        %655 = vmatprep.subr.bf16.mxu0 0
        %656 = vmatpush1.bf16.msra.mxu0 0
        %657 = vmatprep.subr.bf16.mxu0 0
        %658 = vmatpush1.bf16.msra.mxu0 0
        %659 = vmatprep.subr.bf16.mxu0 0
        %660 = vmatpush1.bf16.msra.mxu0 0
        %661 = vmatprep.subr.bf16.mxu0 0
        %662 = vmatpush1.bf16.msra.mxu0 0
        %663 = vmatprep.subr.bf16.mxu0 0
        %664 = vmatpush1.bf16.msra.mxu0 0
        %665 = vmatprep.subr.bf16.mxu0 0
        %666 = vmatpush1.bf16.msra.mxu0 0
        %667 = vmatprep.mubr.bf16.mxu0 0
        %668 = vmatmul.mubr.bf16.gmra.mrb[0].mxu0 %v620
        %v669 = vpop.f32.mrb[0].mxu0
        %v670 = vadd.f32 0.0, %v669
        %v671 = vpop.f32.mrb[0].mxu0
        %v672 = vadd.f32 0.0, %v671
        %v673 = vpop.f32.mrb[0].mxu0
        %v674 = vpop.f32.mrb[0].mxu0
        %675 = vdwg.mxu0
        %676 = vmatprep.subr.bf16.mxu0 %v569
        %677 = vmatpush1.bf16.msra.mxu0 %v568
        %678 = vmatprep.subr.bf16.mxu0 %v573
        %679 = vmatpush1.bf16.msra.mxu0 %v572
        %680 = vmatprep.subr.bf16.mxu0 %v577
        %681 = vmatpush1.bf16.msra.mxu0 %v576
        %682 = vmatprep.subr.bf16.mxu0 %v581
        %683 = vmatpush1.bf16.msra.mxu0 %v580
        %684 = vmatprep.subr.bf16.mxu0 %v585
        %685 = vmatpush1.bf16.msra.mxu0 %v584
        %686 = vmatprep.subr.bf16.mxu0 %v589
        %687 = vmatpush1.bf16.msra.mxu0 %v588
        %688 = vmatprep.subr.bf16.mxu0 %v633
        %689 = vmatpush1.bf16.msra.mxu0 %v630
        %690 = vmatprep.subr.bf16.mxu0 0
        %691 = vmatpush1.bf16.msra.mxu0 0
        %692 = vmatprep.subr.bf16.mxu0 0
        %693 = vmatpush1.bf16.msra.mxu0 0
        %694 = vmatprep.subr.bf16.mxu0 0
        %695 = vmatpush1.bf16.msra.mxu0 0
        %696 = vmatprep.subr.bf16.mxu0 0
        %697 = vmatpush1.bf16.msra.mxu0 0
        %698 = vmatprep.subr.bf16.mxu0 0
        %699 = vmatpush1.bf16.msra.mxu0 0
        %700 = vmatprep.subr.bf16.mxu0 0
        %701 = vmatpush1.bf16.msra.mxu0 0
        %702 = vmatprep.subr.bf16.mxu0 0
        %703 = vmatpush1.bf16.msra.mxu0 0
        %704 = vmatprep.subr.bf16.mxu0 0
        %705 = vmatpush1.bf16.msra.mxu0 0
        %706 = vmatprep.subr.bf16.mxu0 0
        %707 = vmatpush1.bf16.msra.mxu0 0
        %708 = vmatprep.mubr.bf16.mxu0 0
        %709 = vmatmul.mubr.bf16.gmra.mrb[0].mxu0 %v620
        %v710 = vpop.f32.mrb[0].mxu0
        %v711 = vadd.f32 0.0, %v710
        %v712 = vpop.f32.mrb[0].mxu0
        %v713 = vadd.f32 0.0, %v712
        %v714 = vpop.f32.mrb[0].mxu0
        %v715 = vpop.f32.mrb[0].mxu0
        %716 = vdwg.mxu0
        %v745 = vunpack.c.l.b16 %v425
        %v746 = vunpack.c.h.b16 %v425
        %v747 = vunpack.c.l.b16 %v426
        %v748 = vunpack.c.h.b16 %v426
        %v749 = vunpack.c.l.b16 %v427
        %v750 = vunpack.c.h.b16 %v427
        %v751 = vunpack.c.l.b16 %v428
        %v752 = vunpack.c.h.b16 %v428
        %v753 = vunpack.c.l.b16 %v429
        %v754 = vunpack.c.h.b16 %v429
        %v755 = vunpack.c.l.b16 %v430
        %v756 = vunpack.c.h.b16 %v430
        %v757 = vunpack.c.l.b16 %v431
        %v758 = vunpack.c.h.b16 %v431
        %v759 = vunpack.c.l.b16 %v432
        %v760 = vunpack.c.h.b16 %v432
        %v761 = vunpack.c.l.b16 %v433
        %v762 = vunpack.c.h.b16 %v433
        %v763 = vunpack.c.l.b16 %v434
        %v764 = vunpack.c.h.b16 %v434
        %v765 = vunpack.c.l.b16 %v435
        %v766 = vunpack.c.h.b16 %v435
        %v767 = vunpack.c.l.b16 %v436
        %v768 = vunpack.c.h.b16 %v436
        %v769 = vunpack.c.l.b16 %v437
        %v770 = vunpack.c.h.b16 %v437
        %v771 = vunpack.c.l.b16 %v438
        %v772 = vunpack.c.h.b16 %v438
        %v773 = vunpack.c.l.b16 %v439
        %v774 = vunpack.c.h.b16 %v439
        %v775 = vunpack.c.l.b16 %v440
        %v776 = vunpack.c.h.b16 %v440
        %v777 = vunpack.c.l.b16 %v441
        %v778 = vunpack.c.h.b16 %v441
        %v779 = vunpack.c.l.b16 %v442
        %v780 = vunpack.c.h.b16 %v442
        %v781 = vunpack.c.l.b16 %v443
        %v782 = vunpack.c.h.b16 %v443
        %v783 = vunpack.c.l.b16 %v444
        %v784 = vunpack.c.h.b16 %v444
        %v785 = vunpack.c.l.b16 %v445
        %v786 = vunpack.c.h.b16 %v445
        %v787 = vunpack.c.l.b16 %v446
        %v788 = vunpack.c.h.b16 %v446
        %v789 = vunpack.c.l.b16 %v447
        %v790 = vunpack.c.h.b16 %v447
        %v791 = vunpack.c.l.b16 %v448
        %v792 = vunpack.c.h.b16 %v448
        %v793 = vunpack.c.l.b16 %v449
        %v794 = vunpack.c.h.b16 %v449
        %v795 = vunpack.c.l.b16 %v450
        %v796 = vunpack.c.h.b16 %v450
        %v797 = vunpack.c.l.b16 %v451
        %v798 = vunpack.c.h.b16 %v451
        %v799 = vunpack.c.l.b16 %v452
        %v800 = vunpack.c.h.b16 %v452
        %v801 = vpack.c.b16 %v749, %v745
        %v802 = vpack.c.b16 %v750, %v746
        %v803 = vpack.c.b16 %v751, %v747
        %v804 = vpack.c.b16 %v752, %v748
        %v805 = vpack.c.b16 %v757, %v753
        %v806 = vpack.c.b16 %v758, %v754
        %v807 = vpack.c.b16 %v759, %v755
        %v808 = vpack.c.b16 %v760, %v756
        %v809 = vpack.c.b16 %v765, %v761
        %v810 = vpack.c.b16 %v766, %v762
        %v811 = vpack.c.b16 %v767, %v763
        %v812 = vpack.c.b16 %v768, %v764
        %v813 = vpack.c.b16 %v773, %v769
        %v814 = vpack.c.b16 %v774, %v770
        %v815 = vpack.c.b16 %v775, %v771
        %v816 = vpack.c.b16 %v776, %v772
        %v817 = vpack.c.b16 %v781, %v777
        %v818 = vpack.c.b16 %v782, %v778
        %v819 = vpack.c.b16 %v783, %v779
        %v820 = vpack.c.b16 %v784, %v780
        %v821 = vpack.c.b16 %v789, %v785
        %v822 = vpack.c.b16 %v790, %v786
        %v823 = vpack.c.b16 %v791, %v787
        %v824 = vpack.c.b16 %v792, %v788
        %v825 = vpack.c.b16 %v797, %v793
        %v826 = vpack.c.b16 %v798, %v794
        %v827 = vpack.c.b16 %v799, %v795
        %v828 = vpack.c.b16 %v800, %v796
        %v854 = vsel %vm618, %v424, 0
        %v857 = vsel %vm622, %v825, 0
        %v860 = vsel %vm622, %v826, 0
        %v863 = vsel %vm622, %v827, 0
        %v866 = vsel %vm622, %v828, 0
        %868 = vmatprep.subr.bf16.mxu0 %v802
        %869 = vmatpush1.bf16.msra.mxu0 %v801
        %870 = vmatprep.subr.bf16.mxu0 %v806
        %871 = vmatpush1.bf16.msra.mxu0 %v805
        %872 = vmatprep.subr.bf16.mxu0 %v810
        %873 = vmatpush1.bf16.msra.mxu0 %v809
        %874 = vmatprep.subr.bf16.mxu0 %v814
        %875 = vmatpush1.bf16.msra.mxu0 %v813
        %876 = vmatprep.subr.bf16.mxu0 %v818
        %877 = vmatpush1.bf16.msra.mxu0 %v817
        %878 = vmatprep.subr.bf16.mxu0 %v822
        %879 = vmatpush1.bf16.msra.mxu0 %v821
        %880 = vmatprep.subr.bf16.mxu0 %v860
        %881 = vmatpush1.bf16.msra.mxu0 %v857
        %882 = vmatprep.subr.bf16.mxu0 0
        %883 = vmatpush1.bf16.msra.mxu0 0
        %884 = vmatprep.subr.bf16.mxu0 0
        %885 = vmatpush1.bf16.msra.mxu0 0
        %886 = vmatprep.subr.bf16.mxu0 0
        %887 = vmatpush1.bf16.msra.mxu0 0
        %888 = vmatprep.subr.bf16.mxu0 0
        %889 = vmatpush1.bf16.msra.mxu0 0
        %890 = vmatprep.subr.bf16.mxu0 0
        %891 = vmatpush1.bf16.msra.mxu0 0
        %892 = vmatprep.subr.bf16.mxu0 0
        %893 = vmatpush1.bf16.msra.mxu0 0
        %894 = vmatprep.subr.bf16.mxu0 0
        %895 = vmatpush1.bf16.msra.mxu0 0
        %896 = vmatprep.subr.bf16.mxu0 0
        %897 = vmatpush1.bf16.msra.mxu0 0
        %898 = vmatprep.subr.bf16.mxu0 0
        %899 = vmatpush1.bf16.msra.mxu0 0
        %900 = vmatprep.mubr.bf16.mxu0 0
        %901 = vmatmul.mubr.bf16.gmra.mrb[0].mxu0 %v854
        %v902 = vpop.f32.mrb[0].mxu0
        %v903 = vadd.f32 %v670, %v902
        %v904 = vpop.f32.mrb[0].mxu0
        %v905 = vadd.f32 %v672, %v904
        %v906 = vpop.f32.mrb[0].mxu0
        %v907 = vpop.f32.mrb[0].mxu0
        %908 = vdwg.mxu0
        %909 = vmatprep.subr.bf16.mxu0 %v804
        %910 = vmatpush1.bf16.msra.mxu0 %v803
        %911 = vmatprep.subr.bf16.mxu0 %v808
        %912 = vmatpush1.bf16.msra.mxu0 %v807
        %913 = vmatprep.subr.bf16.mxu0 %v812
        %914 = vmatpush1.bf16.msra.mxu0 %v811
        %915 = vmatprep.subr.bf16.mxu0 %v816
        %916 = vmatpush1.bf16.msra.mxu0 %v815
        %917 = vmatprep.subr.bf16.mxu0 %v820
        %918 = vmatpush1.bf16.msra.mxu0 %v819
        %919 = vmatprep.subr.bf16.mxu0 %v824
        %920 = vmatpush1.bf16.msra.mxu0 %v823
        %921 = vmatprep.subr.bf16.mxu0 %v866
        %922 = vmatpush1.bf16.msra.mxu0 %v863
        %923 = vmatprep.subr.bf16.mxu0 0
        %924 = vmatpush1.bf16.msra.mxu0 0
        %925 = vmatprep.subr.bf16.mxu0 0
        %926 = vmatpush1.bf16.msra.mxu0 0
        %927 = vmatprep.subr.bf16.mxu0 0
        %928 = vmatpush1.bf16.msra.mxu0 0
        %929 = vmatprep.subr.bf16.mxu0 0
        %930 = vmatpush1.bf16.msra.mxu0 0
        %931 = vmatprep.subr.bf16.mxu0 0
        %932 = vmatpush1.bf16.msra.mxu0 0
        %933 = vmatprep.subr.bf16.mxu0 0
        %934 = vmatpush1.bf16.msra.mxu0 0
        %935 = vmatprep.subr.bf16.mxu0 0
        %936 = vmatpush1.bf16.msra.mxu0 0
        %937 = vmatprep.subr.bf16.mxu0 0
        %938 = vmatpush1.bf16.msra.mxu0 0
        %939 = vmatprep.subr.bf16.mxu0 0
        %940 = vmatpush1.bf16.msra.mxu0 0
        %941 = vmatprep.mubr.bf16.mxu0 0
        %942 = vmatmul.mubr.bf16.gmra.mrb[0].mxu0 %v854
        %v943 = vpop.f32.mrb[0].mxu0
        %v944 = vadd.f32 %v711, %v943
        %v945 = vpop.f32.mrb[0].mxu0
        %v946 = vadd.f32 %v713, %v945
        %v947 = vpop.f32.mrb[0].mxu0
        %v948 = vpop.f32.mrb[0].mxu0
        %949 = vdwg.mxu0
        %v950 = vld [vmem:[%s4] sm:$0xf]
        %952 = vset.pattern.permute.xlu0 0
        %953 = vperm.xlu0 %952, %v950
        %v954 = vpop.permute.xlu0 %953
        %v956 = vmul.f32 %v903, %v954
        %v957 = vmul.f32 %v905, %v954
        %v958 = vmul.f32 %v944, %v954
        %v959 = vmul.f32 %v946, %v954
        %v960 = vld [vmem:[%s5] sm:$0xf]
        %962 = vset.pattern.permute.xlu0 0
        %963 = vperm.xlu0 %962, %v960
        %v964 = vpop.permute.xlu0 %963
        %v966 = vadd.f32 %v956, %v964
        %v967 = vadd.f32 %v957, %v964
        %v968 = vadd.f32 %v958, %v964
        %v969 = vadd.f32 %v959, %v964
        %v970 = vmax.f32 %v966, 0.0
        %v971 = vmax.f32 %v967, 0.0
        %v972 = vmax.f32 %v968, 0.0
        %v973 = vmax.f32 %v969, 0.0
        %v978 = vcombine.low %v970, %v971
        %v979 = vcombine.low %v972, %v973
        %982 = vst [vmem:[%s421] sm:$0xff] %v978
        %983 = vst [vmem:[%s421 + $0x8] sm:$0xff] %v979
        %s984 = smul.u32 4, %s17
        %p985 = scmp.lt.s32.totalorder %s984, 7
        %s986 = scalar_select %p985, %s984, 7
        %s987 = smul.addr %s986, 4
        %s988 = scalar_lea.vmem %s6, %s987
        // Predicated region
        $region91: #{upconv3d_block.5} parent=81 // pred_check
          %p989 = pneg %p171
        $region92: #{upconv3d_block.5} parent=81 // pred_check_branch
          %991 = sbr.rel (%p989) target = $region94
        $region93: #{upconv3d_block.5} parent=81 // pred_region
          %s992 = smul.u32 4, %s17
        $region94: #{upconv3d_block.5} parent=81 // pred_fallthru
          _
      $region82: #{upconv3d_block.5} parent=5 // pred_fallthru
        _
      %p993 = scmp.le.s32.totalorder 2, %s12
      // Predicated region
      $region95: #{upconv3d_block.5} parent=5 // pred_check
        %p994 = pneg %p993
      $region96: #{upconv3d_block.5} parent=5 // pred_check_branch
        %996 = sbr.rel (%p994) target = $region98
      $region97: #{upconv3d_block.5} parent=5 // pred_region
        %s997 = ssub.s32 %s12, 2
        // Predicated region
        $region99: #{upconv3d_block.5} parent=97 // pred_check
          %p998 = pneg %p177
        $region100: #{upconv3d_block.5} parent=97 // pred_check_branch
          %1000 = sbr.rel (%p998) target = $region102
        $region101: #{upconv3d_block.5} parent=97 // pred_region
          %s1001 = smul.u32 4, %s18
          %p1002 = scmp.lt.s32.totalorder %s1001, 7
          %s1003 = scalar_select %p1002, %s1001, 7
          %s1004 = smul.addr %s1003, 4
          %s1005 = scalar_lea.vmem %s6, %s1004
        $region102: #{upconv3d_block.5} parent=97 // pred_fallthru
          _
      $region98: #{upconv3d_block.5} parent=5 // pred_fallthru
        _
    $region6: #{upconv3d_block.5} parent=1 // loop_footer
      %s16 = sadd.s32 1, %s12
    $region7: #{upconv3d_block.5} parent=1 // loop_footer_branch
      %11 = sbr.rel target = $region3
    $region8: #{upconv3d_block.5} parent=1 // loop_exit
      _

// kernel: upconv3d_block.6
$region0: #{upconv3d_block.6}
  #allocation0 [shape = 'u32[]', space=smem, size = 0x4, offset = 0x4, fixed_abs, tag = 'smem constant byte address 0x4 - core index']
  #allocation1 [shape = 'u32[144,128]{1,0:T(1,128)}', space=vmem, size = 0x12000, scoped, tag = 'internal scratch']
  %s0 = inlined_call_operand.vmem [shape: bf16[4,108], index: 0, kind: input, shape index: {}]
  %s1 = inlined_call_operand.vmem [shape: bf16[108,1024], index: 1, kind: input, shape index: {}]
  %s2 = inlined_call_operand.vmem [shape: f32[4,1], index: 2, kind: input, shape index: {}]
  %s3 = inlined_call_operand.vmem [shape: f32[4,1], index: 3, kind: input, shape index: {}]
  %s4 = inlined_call_operand.vmem [shape: f32[4,1024], index: 4, kind: output, shape index: {}]
  %s5 = sld [smem:[#allocation0]]
  $region72: #{upconv3d_block.6} parent=0
    _
  %s7 = ssub.s32 1, %s5
  %s8 = scalar_select 0, %s7, %s5
  $region1: #{upconv3d_block.6} parent=0
    #allocation2 [shape = 'u8[229376]{0}', space=vmem, size = 0x38000, scoped, tag = 'input window, operand 1']
    loop: start=0, step=1, limit=4
    $region2: #{upconv3d_block.6} parent=1 // loop_pre_header
      _
    $region3: #{upconv3d_block.6} parent=1 // loop_header
      %s10 = sphi 0, %s14
      %p11 = scmp.ge.s32.totalorder %s10, 4
      %s18 = sphi 0, %s18
      %s20 = sphi 0, %s18
      %s21 = sphi 0, %s20
      %s35 = sphi 0, %s21
      %s41 = sphi 0, %s43
      %s44 = sphi 0, %s41
      %s45 = sphi 0, %s44
      %s61 = sphi 0, %s45
      %s65 = sphi 0, %s65
      %s67 = sphi 0, %s65
      %s68 = sphi 0, %s67
      %s82 = sphi 0, %s68
      %s86 = sphi 0, %s86
      %s88 = sphi 0, %s86
      %s89 = sphi 0, %s88
      %s103 = sphi 0, %s89
      %s109 = sphi 0, %s111
      %s112 = sphi 0, %s109
      %s113 = sphi 0, %s112
      %s129 = sphi 0, %s113
    $region4: #{upconv3d_block.6} parent=1 // loop_header_branch
      %13 = sbr.rel (%p11) target = $region8
    $region5: #{upconv3d_block.6} parent=1 // loop_body
      %s15 = ssub.s32 %s10, 1
      %s16 = ssub.s32 %s10, 2
      %s17 = sadd.s32 %s10, 1
      %s19 = sadd.s32 %s18, 1
      %p22 = scmp.eq.s32.totalorder %s10, 1
      %p23 = scmp.ne.s32.totalorder %s18, %s20
      %p24 = scmp.eq.s32.totalorder %s10, 0
      %p25 = por %p23, %p24
      %p26 = scmp.ne.s32.totalorder %s18, %s20
      %p27 = scmp.eq.s32.totalorder %s15, 1
      %p28 = por %p26, %p27
      %p29 = scmp.ne.s32.totalorder %s20, %s21
      %p30 = scmp.eq.s32.totalorder %s15, 0
      %p31 = por %p29, %p30
      %p32 = scmp.ne.s32.totalorder %s20, %s21
      %p33 = scmp.eq.s32.totalorder %s16, 1
      %p34 = por %p32, %p33
      %p36 = scmp.ne.s32.totalorder %s21, %s35
      %p37 = scmp.eq.s32.totalorder %s16, 0
      %p38 = por %p36, %p37
      %s39 = ssub.s32 %s10, %s17
      %p40 = scmp.eq.s32.totalorder %s39, 0
      %s42 = sadd.s32 %s41, 1
      %s43 = scalar_select %p40, %s41, %s42
      %p46 = pneg %p40
      %p47 = scmp.eq.s32.totalorder %s10, 1
      %p48 = por %p46, %p47
      %p49 = scmp.ne.s32.totalorder %s41, %s44
      %p50 = scmp.eq.s32.totalorder %s10, 0
      %p51 = por %p49, %p50
      %p52 = scmp.ne.s32.totalorder %s41, %s44
      %p53 = scmp.eq.s32.totalorder %s15, 1
      %p54 = por %p52, %p53
      %p55 = scmp.ne.s32.totalorder %s44, %s45
      %p56 = scmp.eq.s32.totalorder %s15, 0
      %p57 = por %p55, %p56
      %p58 = scmp.ne.s32.totalorder %s44, %s45
      %p59 = scmp.eq.s32.totalorder %s16, 1
      %p60 = por %p58, %p59
      %p62 = scmp.ne.s32.totalorder %s45, %s61
      %p63 = scmp.eq.s32.totalorder %s16, 0
      %p64 = por %p62, %p63
      %s66 = sadd.s32 %s65, 1
      %p69 = scmp.eq.s32.totalorder %s10, 1
      %p70 = scmp.ne.s32.totalorder %s65, %s67
      %p71 = scmp.eq.s32.totalorder %s10, 0
      %p72 = por %p70, %p71
      %p73 = scmp.ne.s32.totalorder %s65, %s67
      %p74 = scmp.eq.s32.totalorder %s15, 1
      %p75 = por %p73, %p74
      %p76 = scmp.ne.s32.totalorder %s67, %s68
      %p77 = scmp.eq.s32.totalorder %s15, 0
      %p78 = por %p76, %p77
      %p79 = scmp.ne.s32.totalorder %s67, %s68
      %p80 = scmp.eq.s32.totalorder %s16, 1
      %p81 = por %p79, %p80
      %p83 = scmp.ne.s32.totalorder %s68, %s82
      %p84 = scmp.eq.s32.totalorder %s16, 0
      %p85 = por %p83, %p84
      %s87 = sadd.s32 %s86, 1
      %p90 = scmp.eq.s32.totalorder %s10, 1
      %p91 = scmp.ne.s32.totalorder %s86, %s88
      %p92 = scmp.eq.s32.totalorder %s10, 0
      %p93 = por %p91, %p92
      %p94 = scmp.ne.s32.totalorder %s86, %s88
      %p95 = scmp.eq.s32.totalorder %s15, 1
      %p96 = por %p94, %p95
      %p97 = scmp.ne.s32.totalorder %s88, %s89
      %p98 = scmp.eq.s32.totalorder %s15, 0
      %p99 = por %p97, %p98
      %p100 = scmp.ne.s32.totalorder %s88, %s89
      %p101 = scmp.eq.s32.totalorder %s16, 1
      %p102 = por %p100, %p101
      %p104 = scmp.ne.s32.totalorder %s89, %s103
      %p105 = scmp.eq.s32.totalorder %s16, 0
      %p106 = por %p104, %p105
      %s107 = ssub.s32 %s10, %s17
      %p108 = scmp.eq.s32.totalorder %s107, 0
      %s110 = sadd.s32 %s109, 1
      %s111 = scalar_select %p108, %s109, %s110
      %p114 = pneg %p108
      %p115 = scmp.eq.s32.totalorder %s10, 1
      %p116 = por %p114, %p115
      %p117 = scmp.ne.s32.totalorder %s109, %s112
      %p118 = scmp.eq.s32.totalorder %s10, 0
      %p119 = por %p117, %p118
      %p120 = scmp.ne.s32.totalorder %s109, %s112
      %p121 = scmp.eq.s32.totalorder %s15, 1
      %p122 = por %p120, %p121
      %p123 = scmp.ne.s32.totalorder %s112, %s113
      %p124 = scmp.eq.s32.totalorder %s15, 0
      %p125 = por %p123, %p124
      %p126 = scmp.ne.s32.totalorder %s112, %s113
      %p127 = scmp.eq.s32.totalorder %s16, 1
      %p128 = por %p126, %p127
      %p130 = scmp.ne.s32.totalorder %s113, %s129
      %p131 = scmp.eq.s32.totalorder %s16, 0
      %p132 = por %p130, %p131
      %p133 = scmp.le.s32.totalorder 1, %s10
      %p134 = scmp.lt.s32.totalorder %s10, 3
      %p135 = pnand %p133, %p134
      %p136 = pneg %p135
      // Predicated region
      $region9: #{upconv3d_block.6} parent=5 // pred_check
        _
      $region10: #{upconv3d_block.6} parent=5 // pred_check_branch
        %138 = sbr.rel (%p135) target = $region12
      $region11: #{upconv3d_block.6} parent=5 // pred_region
        %s139 = ssub.s32 %s10, 1
        // Predicated region
        $region13: #{upconv3d_block.6} parent=11 // pred_check
          %p140 = pneg %p31
        $region14: #{upconv3d_block.6} parent=11 // pred_check_branch
          %142 = sbr.rel (%p140) target = $region16
        $region15: #{upconv3d_block.6} parent=11 // pred_region
          _
        $region16: #{upconv3d_block.6} parent=11 // pred_fallthru
          _
        // Predicated region
        $region17: #{upconv3d_block.6} parent=11 // pred_check
          %p143 = pneg %p78
        $region18: #{upconv3d_block.6} parent=11 // pred_check_branch
          %145 = sbr.rel (%p143) target = $region20
        $region19: #{upconv3d_block.6} parent=11 // pred_region
          _
        $region20: #{upconv3d_block.6} parent=11 // pred_fallthru
          _
        // Predicated region
        $region21: #{upconv3d_block.6} parent=11 // pred_check
          %p146 = pneg %p99
        $region22: #{upconv3d_block.6} parent=11 // pred_check_branch
          %148 = sbr.rel (%p146) target = $region24
        $region23: #{upconv3d_block.6} parent=11 // pred_region
          _
        $region24: #{upconv3d_block.6} parent=11 // pred_fallthru
          _
      $region12: #{upconv3d_block.6} parent=5 // pred_fallthru
        _
      %p149 = scmp.lt.s32.totalorder %s10, 2
      // Predicated region
      $region25: #{upconv3d_block.6} parent=5 // pred_check
        %p150 = pneg %p149
      $region26: #{upconv3d_block.6} parent=5 // pred_check_branch
        %152 = sbr.rel (%p150) target = $region28
      $region27: #{upconv3d_block.6} parent=5 // pred_region
        // Predicated region
        $region29: #{upconv3d_block.6} parent=27 // pred_check
          %p153 = pneg %p51
        $region30: #{upconv3d_block.6} parent=27 // pred_check_branch
          %155 = sbr.rel (%p153) target = $region32
        $region31: #{upconv3d_block.6} parent=27 // pred_region
          %s156 = sand.u32 %s41, 1
          %s157 = sand.u32 %s41, 1
          %s158 = smul.addr %s157, 224
          %s159 = scalar_lea.vmem [#allocation2], %s158
          %s160 = smul.u32 4, %s10
          %s161 = smul.addr %s160, 4
          %s162 = scalar_lea.vmem %s1, %s161
          // Predicated region
          $region33: #{upconv3d_block.6} parent=31 // pred_check
            _
          $region34: #{upconv3d_block.6} parent=31 // pred_check_branch
            %164 = sbr.rel (0) target = $region36
          $region35: #{upconv3d_block.6} parent=31 // pred_region
            // Predicated region
            $region37: #{upconv3d_block.6} parent=35 // pred_check
              _
            $region38: #{upconv3d_block.6} parent=35 // pred_check_branch
              %166 = sbr.rel (0) target = $region40
            $region39: #{upconv3d_block.6} parent=35 // pred_region
              loop: start=0, step=1, limit=1
              $region41: #{upconv3d_block.6} parent=39 // loop_pre_header
                _
              $region42: #{upconv3d_block.6} parent=39 // loop_header
                %s168 = sphi 0, %s172
                %p169 = scmp.ge.s32.totalorder %s168, 1
                %s173 = sphi %s162, %s162
                %s174 = sphi %s159, %s159
              $region43: #{upconv3d_block.6} parent=39 // loop_header_branch
                %171 = sbr.rel (%p169) target = $region47
              $region44: #{upconv3d_block.6} parent=39 // loop_body
                %v175 = vld [vmem:[%s173] sm:$0xff]
                %176 = vst [vmem:[%s174] sm:$0xff] %v175
                %v177 = vld [vmem:[%s173 + $0x8] sm:$0xff]
                %178 = vst [vmem:[%s174 + $0x8] sm:$0xff] %v177
                %v179 = vld [vmem:[%s173 + $0x20] sm:$0xff]
                %180 = vst [vmem:[%s174 + $0x10] sm:$0xff] %v179
                %v181 = vld [vmem:[%s173 + $0x28] sm:$0xff]
                %182 = vst [vmem:[%s174 + $0x18] sm:$0xff] %v181
                %v183 = vld [vmem:[%s173 + $0x40] sm:$0xff]
                %184 = vst [vmem:[%s174 + $0x20] sm:$0xff] %v183
                %v185 = vld [vmem:[%s173 + $0x48] sm:$0xff]
                %186 = vst [vmem:[%s174 + $0x28] sm:$0xff] %v185
                %v187 = vld [vmem:[%s173 + $0x60] sm:$0xff]
                %188 = vst [vmem:[%s174 + $0x30] sm:$0xff] %v187
                %v189 = vld [vmem:[%s173 + $0x68] sm:$0xff]
                %190 = vst [vmem:[%s174 + $0x38] sm:$0xff] %v189
                %v191 = vld [vmem:[%s173 + $0x80] sm:$0xff]
                %192 = vst [vmem:[%s174 + $0x40] sm:$0xff] %v191
                %v193 = vld [vmem:[%s173 + $0x88] sm:$0xff]
                %194 = vst [vmem:[%s174 + $0x48] sm:$0xff] %v193
                %v195 = vld [vmem:[%s173 + $0xa0] sm:$0xff]
                %196 = vst [vmem:[%s174 + $0x50] sm:$0xff] %v195
                %v197 = vld [vmem:[%s173 + $0xa8] sm:$0xff]
                %198 = vst [vmem:[%s174 + $0x58] sm:$0xff] %v197
                %v199 = vld [vmem:[%s173 + $0xc0] sm:$0xff]
                %200 = vst [vmem:[%s174 + $0x60] sm:$0xff] %v199
                %v201 = vld [vmem:[%s173 + $0xc8] sm:$0xff]
                %202 = vst [vmem:[%s174 + $0x68] sm:$0xff] %v201
                %v203 = vld [vmem:[%s173 + $0xe0] sm:$0xff]
                %204 = vst [vmem:[%s174 + $0x70] sm:$0xff] %v203
                %v205 = vld [vmem:[%s173 + $0xe8] sm:$0xff]
                %206 = vst [vmem:[%s174 + $0x78] sm:$0xff] %v205
                %v207 = vld [vmem:[%s173 + $0x100] sm:$0xff]
                %208 = vst [vmem:[%s174 + $0x80] sm:$0xff] %v207
                %v209 = vld [vmem:[%s173 + $0x108] sm:$0xff]
                %210 = vst [vmem:[%s174 + $0x88] sm:$0xff] %v209
                %v211 = vld [vmem:[%s173 + $0x120] sm:$0xff]
                %212 = vst [vmem:[%s174 + $0x90] sm:$0xff] %v211
                %v213 = vld [vmem:[%s173 + $0x128] sm:$0xff]
                %214 = vst [vmem:[%s174 + $0x98] sm:$0xff] %v213
                %v215 = vld [vmem:[%s173 + $0x140] sm:$0xff]
                %216 = vst [vmem:[%s174 + $0xa0] sm:$0xff] %v215
                %v217 = vld [vmem:[%s173 + $0x148] sm:$0xff]
                %218 = vst [vmem:[%s174 + $0xa8] sm:$0xff] %v217
                %v219 = vld [vmem:[%s173 + $0x160] sm:$0xff]
                %220 = vst [vmem:[%s174 + $0xb0] sm:$0xff] %v219
                %v221 = vld [vmem:[%s173 + $0x168] sm:$0xff]
                %222 = vst [vmem:[%s174 + $0xb8] sm:$0xff] %v221
                %v223 = vld [vmem:[%s173 + $0x180] sm:$0xff]
                %224 = vst [vmem:[%s174 + $0xc0] sm:$0xff] %v223
                %v225 = vld [vmem:[%s173 + $0x188] sm:$0xff]
                %226 = vst [vmem:[%s174 + $0xc8] sm:$0xff] %v225
                %v227 = vld [vmem:[%s173 + $0x1a0] sm:$0xff]
                %228 = vst [vmem:[%s174 + $0xd0] sm:$0xff] %v227
                %v229 = vld [vmem:[%s173 + $0x1a8] sm:$0xff]
                %230 = vst [vmem:[%s174 + $0xd8] sm:$0xff] %v229
              $region45: #{upconv3d_block.6} parent=39 // loop_footer
                %s172 = sadd.s32 1, %s168
              $region46: #{upconv3d_block.6} parent=39 // loop_footer_branch
                %167 = sbr.rel target = $region42
              $region47: #{upconv3d_block.6} parent=39 // loop_exit
                _
            $region40: #{upconv3d_block.6} parent=35 // pred_fallthru
              _
            // Predicated region
            $region48: #{upconv3d_block.6} parent=35 // pred_check
              _
            $region49: #{upconv3d_block.6} parent=35 // pred_check_branch
              %232 = sbr.rel target = $region51
            $region50: #{upconv3d_block.6} parent=35 // pred_region
              _
            $region51: #{upconv3d_block.6} parent=35 // pred_fallthru
              _
          $region36: #{upconv3d_block.6} parent=31 // pred_fallthru
            _
          %233 = vnop
        $region32: #{upconv3d_block.6} parent=27 // pred_fallthru
          _
      $region28: #{upconv3d_block.6} parent=5 // pred_fallthru
        _
      %p234 = scmp.le.s32.totalorder 1, %s10
      %p235 = scmp.lt.s32.totalorder %s10, 3
      %p236 = pnand %p234, %p235
      %p237 = pneg %p236
      // Predicated region
      $region52: #{upconv3d_block.6} parent=5 // pred_check
        _
      $region53: #{upconv3d_block.6} parent=5 // pred_check_branch
        %239 = sbr.rel (%p236) target = $region55
      $region54: #{upconv3d_block.6} parent=5 // pred_region
        %s240 = ssub.s32 %s10, 1
        %s241 = sand.u32 %s44, 1
        %s242 = sand.u32 %s44, 1
        %s243 = smul.addr %s242, 224
        %s244 = scalar_lea.vmem [#allocation2], %s243
        // Predicated region
        $region56: #{upconv3d_block.6} parent=54 // pred_check
          %p245 = pneg %p57
        $region57: #{upconv3d_block.6} parent=54 // pred_check_branch
          %247 = sbr.rel (%p245) target = $region59
        $region58: #{upconv3d_block.6} parent=54 // pred_region
          _
        $region59: #{upconv3d_block.6} parent=54 // pred_fallthru
          _
        %p248 = pneg %p31
        %p249 = pneg %p28
        %s250 = sand.u32 %s44, 1
        %s251 = sand.u32 %s44, 1
        %s252 = smul.addr %s251, 224
        %s253 = scalar_lea.vmem [#allocation2], %s252
        %p254 = pneg %p57
        %p255 = pneg %p54
        %p256 = pneg %p78
        %p257 = pneg %p75
        %p258 = pneg %p99
        %p259 = pneg %p96
        %p260 = pneg %p125
        %p261 = pneg %p122
        %s262 = smul.u32 4, %s15
        %p263 = scmp.lt.s32.totalorder %s262, 7
        %s264 = scalar_select %p263, %s262, 7
        %s265 = smul.addr %s264, 4
        %s266 = scalar_lea.vmem %s4, %s265
        %s267 = smul.u32 4, %s15
        %s268 = smul.u32 4, %s15
        %p269 = scmp.lt.s32.totalorder %s268, 7
        %s270 = scalar_select %p269, %s268, 7
        %s271 = smul.addr %s270, 4
        %s272 = scalar_lea.vmem %s4, %s271
        %s273 = smul.u32 4, %s15
        %v275 = vld [vmem:[%s0] sm:$0x3]
        %v276 = vld [vmem:[%s244] sm:$0xff]
        %v277 = vld [vmem:[%s244 + $0x8] sm:$0xff]
        %v278 = vld [vmem:[%s244 + $0x10] sm:$0xff]
        %v279 = vld [vmem:[%s244 + $0x18] sm:$0xff]
        %v280 = vld [vmem:[%s244 + $0x20] sm:$0xff]
        %v281 = vld [vmem:[%s244 + $0x28] sm:$0xff]
        %v282 = vld [vmem:[%s244 + $0x30] sm:$0xff]
        %v283 = vld [vmem:[%s244 + $0x38] sm:$0xff]
        %v284 = vld [vmem:[%s244 + $0x40] sm:$0xff]
        %v285 = vld [vmem:[%s244 + $0x48] sm:$0xff]
        %v286 = vld [vmem:[%s244 + $0x50] sm:$0xff]
        %v287 = vld [vmem:[%s244 + $0x58] sm:$0xff]
        %v288 = vld [vmem:[%s244 + $0x60] sm:$0xff]
        %v289 = vld [vmem:[%s244 + $0x68] sm:$0xff]
        %v290 = vld [vmem:[%s244 + $0x70] sm:$0xff]
        %v291 = vld [vmem:[%s244 + $0x78] sm:$0xff]
        %v292 = vld [vmem:[%s244 + $0x80] sm:$0xff]
        %v293 = vld [vmem:[%s244 + $0x88] sm:$0xff]
        %v294 = vld [vmem:[%s244 + $0x90] sm:$0xff]
        %v295 = vld [vmem:[%s244 + $0x98] sm:$0xff]
        %v296 = vld [vmem:[%s244 + $0xa0] sm:$0xff]
        %v297 = vld [vmem:[%s244 + $0xa8] sm:$0xff]
        %v298 = vld [vmem:[%s244 + $0xb0] sm:$0xff]
        %v299 = vld [vmem:[%s244 + $0xb8] sm:$0xff]
        %v300 = vld [vmem:[%s244 + $0xc0] sm:$0xff]
        %v301 = vld [vmem:[%s244 + $0xc8] sm:$0xff]
        %v302 = vld [vmem:[%s244 + $0xd0] sm:$0x33]
        %v303 = vld [vmem:[%s244 + $0xd8] sm:$0x33]
        %v332 = vunpack.c.l.b16 %v276
        %v333 = vunpack.c.h.b16 %v276
        %v334 = vunpack.c.l.b16 %v277
        %v335 = vunpack.c.h.b16 %v277
        %v336 = vunpack.c.l.b16 %v278
        %v337 = vunpack.c.h.b16 %v278
        %v338 = vunpack.c.l.b16 %v279
        %v339 = vunpack.c.h.b16 %v279
        %v340 = vunpack.c.l.b16 %v280
        %v341 = vunpack.c.h.b16 %v280
        %v342 = vunpack.c.l.b16 %v281
        %v343 = vunpack.c.h.b16 %v281
        %v344 = vunpack.c.l.b16 %v282
        %v345 = vunpack.c.h.b16 %v282
        %v346 = vunpack.c.l.b16 %v283
        %v347 = vunpack.c.h.b16 %v283
        %v348 = vunpack.c.l.b16 %v284
        %v349 = vunpack.c.h.b16 %v284
        %v350 = vunpack.c.l.b16 %v285
        %v351 = vunpack.c.h.b16 %v285
        %v352 = vunpack.c.l.b16 %v286
        %v353 = vunpack.c.h.b16 %v286
        %v354 = vunpack.c.l.b16 %v287
        %v355 = vunpack.c.h.b16 %v287
        %v356 = vunpack.c.l.b16 %v288
        %v357 = vunpack.c.h.b16 %v288
        %v358 = vunpack.c.l.b16 %v289
        %v359 = vunpack.c.h.b16 %v289
        %v360 = vunpack.c.l.b16 %v290
        %v361 = vunpack.c.h.b16 %v290
        %v362 = vunpack.c.l.b16 %v291
        %v363 = vunpack.c.h.b16 %v291
        %v364 = vunpack.c.l.b16 %v292
        %v365 = vunpack.c.h.b16 %v292
        %v366 = vunpack.c.l.b16 %v293
        %v367 = vunpack.c.h.b16 %v293
        %v368 = vunpack.c.l.b16 %v294
        %v369 = vunpack.c.h.b16 %v294
        %v370 = vunpack.c.l.b16 %v295
        %v371 = vunpack.c.h.b16 %v295
        %v372 = vunpack.c.l.b16 %v296
        %v373 = vunpack.c.h.b16 %v296
        %v374 = vunpack.c.l.b16 %v297
        %v375 = vunpack.c.h.b16 %v297
        %v376 = vunpack.c.l.b16 %v298
        %v377 = vunpack.c.h.b16 %v298
        %v378 = vunpack.c.l.b16 %v299
        %v379 = vunpack.c.h.b16 %v299
        %v380 = vunpack.c.l.b16 %v300
        %v381 = vunpack.c.h.b16 %v300
        %v382 = vunpack.c.l.b16 %v301
        %v383 = vunpack.c.h.b16 %v301
        %v384 = vunpack.c.l.b16 %v302
        %v385 = vunpack.c.h.b16 %v302
        %v386 = vunpack.c.l.b16 %v303
        %v387 = vunpack.c.h.b16 %v303
        %v388 = vpack.c.b16 %v336, %v332
        %v389 = vpack.c.b16 %v337, %v333
        %v390 = vpack.c.b16 %v338, %v334
        %v391 = vpack.c.b16 %v339, %v335
        %v392 = vpack.c.b16 %v344, %v340
        %v393 = vpack.c.b16 %v345, %v341
        %v394 = vpack.c.b16 %v346, %v342
        %v395 = vpack.c.b16 %v347, %v343
        %v396 = vpack.c.b16 %v352, %v348
        %v397 = vpack.c.b16 %v353, %v349
        %v398 = vpack.c.b16 %v354, %v350
        %v399 = vpack.c.b16 %v355, %v351
        %v400 = vpack.c.b16 %v360, %v356
        %v401 = vpack.c.b16 %v361, %v357
        %v402 = vpack.c.b16 %v362, %v358
        %v403 = vpack.c.b16 %v363, %v359
        %v404 = vpack.c.b16 %v368, %v364
        %v405 = vpack.c.b16 %v369, %v365
        %v406 = vpack.c.b16 %v370, %v366
        %v407 = vpack.c.b16 %v371, %v367
        %v408 = vpack.c.b16 %v376, %v372
        %v409 = vpack.c.b16 %v377, %v373
        %v410 = vpack.c.b16 %v378, %v374
        %v411 = vpack.c.b16 %v379, %v375
        %v412 = vpack.c.b16 %v384, %v380
        %v413 = vpack.c.b16 %v385, %v381
        %v414 = vpack.c.b16 %v386, %v382
        %v415 = vpack.c.b16 %v387, %v383
        %vm440 = vcmask 883712
        %v442 = vsel %vm440, %v275, 0
        %vm444 = vcmask 1045504
        %v446 = vsel %vm444, %v412, 0
        %v449 = vsel %vm444, %v413, 0
        %v452 = vsel %vm444, %v414, 0
        %v455 = vsel %vm444, %v415, 0
        %457 = vmatprep.subr.bf16.mxu0 %v389
        %458 = vmatpush1.bf16.msra.mxu0 %v388
        %459 = vmatprep.subr.bf16.mxu0 %v393
        %460 = vmatpush1.bf16.msra.mxu0 %v392
        %461 = vmatprep.subr.bf16.mxu0 %v397
        %462 = vmatpush1.bf16.msra.mxu0 %v396
        %463 = vmatprep.subr.bf16.mxu0 %v401
        %464 = vmatpush1.bf16.msra.mxu0 %v400
        %465 = vmatprep.subr.bf16.mxu0 %v405
        %466 = vmatpush1.bf16.msra.mxu0 %v404
        %467 = vmatprep.subr.bf16.mxu0 %v409
        %468 = vmatpush1.bf16.msra.mxu0 %v408
        %469 = vmatprep.subr.bf16.mxu0 %v449
        %470 = vmatpush1.bf16.msra.mxu0 %v446
        %471 = vmatprep.subr.bf16.mxu0 0
        %472 = vmatpush1.bf16.msra.mxu0 0
        %473 = vmatprep.subr.bf16.mxu0 0
        %474 = vmatpush1.bf16.msra.mxu0 0
        %475 = vmatprep.subr.bf16.mxu0 0
        %476 = vmatpush1.bf16.msra.mxu0 0
        %477 = vmatprep.subr.bf16.mxu0 0
        %478 = vmatpush1.bf16.msra.mxu0 0
        %479 = vmatprep.subr.bf16.mxu0 0
        %480 = vmatpush1.bf16.msra.mxu0 0
        %481 = vmatprep.subr.bf16.mxu0 0
        %482 = vmatpush1.bf16.msra.mxu0 0
        %483 = vmatprep.subr.bf16.mxu0 0
        %484 = vmatpush1.bf16.msra.mxu0 0
        %485 = vmatprep.subr.bf16.mxu0 0
        %486 = vmatpush1.bf16.msra.mxu0 0
        %487 = vmatprep.subr.bf16.mxu0 0
        %488 = vmatpush1.bf16.msra.mxu0 0
        %489 = vmatprep.mubr.bf16.mxu0 0
        %490 = vmatmul.mubr.bf16.gmra.mrb[0].mxu0 %v442
        %v491 = vpop.f32.mrb[0].mxu0
        %v492 = vadd.f32 0.0, %v491
        %v493 = vpop.f32.mrb[0].mxu0
        %v494 = vadd.f32 0.0, %v493
        %v495 = vpop.f32.mrb[0].mxu0
        %v496 = vpop.f32.mrb[0].mxu0
        %497 = vdwg.mxu0
        %498 = vmatprep.subr.bf16.mxu0 %v391
        %499 = vmatpush1.bf16.msra.mxu0 %v390
        %500 = vmatprep.subr.bf16.mxu0 %v395
        %501 = vmatpush1.bf16.msra.mxu0 %v394
        %502 = vmatprep.subr.bf16.mxu0 %v399
        %503 = vmatpush1.bf16.msra.mxu0 %v398
        %504 = vmatprep.subr.bf16.mxu0 %v403
        %505 = vmatpush1.bf16.msra.mxu0 %v402
        %506 = vmatprep.subr.bf16.mxu0 %v407
        %507 = vmatpush1.bf16.msra.mxu0 %v406
        %508 = vmatprep.subr.bf16.mxu0 %v411
        %509 = vmatpush1.bf16.msra.mxu0 %v410
        %510 = vmatprep.subr.bf16.mxu0 %v455
        %511 = vmatpush1.bf16.msra.mxu0 %v452
        %512 = vmatprep.subr.bf16.mxu0 0
        %513 = vmatpush1.bf16.msra.mxu0 0
        %514 = vmatprep.subr.bf16.mxu0 0
        %515 = vmatpush1.bf16.msra.mxu0 0
        %516 = vmatprep.subr.bf16.mxu0 0
        %517 = vmatpush1.bf16.msra.mxu0 0
        %518 = vmatprep.subr.bf16.mxu0 0
        %519 = vmatpush1.bf16.msra.mxu0 0
        %520 = vmatprep.subr.bf16.mxu0 0
        %521 = vmatpush1.bf16.msra.mxu0 0
        %522 = vmatprep.subr.bf16.mxu0 0
        %523 = vmatpush1.bf16.msra.mxu0 0
        %524 = vmatprep.subr.bf16.mxu0 0
        %525 = vmatpush1.bf16.msra.mxu0 0
        %526 = vmatprep.subr.bf16.mxu0 0
        %527 = vmatpush1.bf16.msra.mxu0 0
        %528 = vmatprep.subr.bf16.mxu0 0
        %529 = vmatpush1.bf16.msra.mxu0 0
        %530 = vmatprep.mubr.bf16.mxu0 0
        %531 = vmatmul.mubr.bf16.gmra.mrb[0].mxu0 %v442
        %v532 = vpop.f32.mrb[0].mxu0
        %v533 = vadd.f32 0.0, %v532
        %v534 = vpop.f32.mrb[0].mxu0
        %v535 = vadd.f32 0.0, %v534
        %v536 = vpop.f32.mrb[0].mxu0
        %v537 = vpop.f32.mrb[0].mxu0
        %538 = vdwg.mxu0
        %v539 = vld [vmem:[%s2] sm:$0xf]
        %541 = vset.pattern.permute.xlu0 0
        %542 = vperm.xlu0 %541, %v539
        %v543 = vpop.permute.xlu0 %542
        %v545 = vmul.f32 %v492, %v543
        %v546 = vmul.f32 %v494, %v543
        %v547 = vmul.f32 %v533, %v543
        %v548 = vmul.f32 %v535, %v543
        %v549 = vld [vmem:[%s3] sm:$0xf]
        %551 = vset.pattern.permute.xlu0 0
        %552 = vperm.xlu0 %551, %v549
        %v553 = vpop.permute.xlu0 %552
        %v555 = vadd.f32 %v545, %v553
        %v556 = vadd.f32 %v546, %v553
        %v557 = vadd.f32 %v547, %v553
        %v558 = vadd.f32 %v548, %v553
        %v559 = vmax.f32 %v555, 0.0
        %v560 = vmax.f32 %v556, 0.0
        %v561 = vmax.f32 %v557, 0.0
        %v562 = vmax.f32 %v558, 0.0
        %v567 = vcombine.low %v559, %v560
        %v568 = vcombine.low %v561, %v562
        %571 = vst [vmem:[%s272] sm:$0xff] %v567
        %572 = vst [vmem:[%s272 + $0x8] sm:$0xff] %v568
        %s573 = smul.u32 4, %s15
        %p574 = scmp.lt.s32.totalorder %s573, 7
        %s575 = scalar_select %p574, %s573, 7
        %s576 = smul.addr %s575, 4
        %s577 = scalar_lea.vmem %s4, %s576
        // Predicated region
        $region60: #{upconv3d_block.6} parent=54 // pred_check
          %p578 = pneg %p122
        $region61: #{upconv3d_block.6} parent=54 // pred_check_branch
          %580 = sbr.rel (%p578) target = $region63
        $region62: #{upconv3d_block.6} parent=54 // pred_region
          %s581 = smul.u32 4, %s15
        $region63: #{upconv3d_block.6} parent=54 // pred_fallthru
          _
      $region55: #{upconv3d_block.6} parent=5 // pred_fallthru
        _
      %p582 = scmp.le.s32.totalorder 2, %s10
      // Predicated region
      $region64: #{upconv3d_block.6} parent=5 // pred_check
        %p583 = pneg %p582
      $region65: #{upconv3d_block.6} parent=5 // pred_check_branch
        %585 = sbr.rel (%p583) target = $region67
      $region66: #{upconv3d_block.6} parent=5 // pred_region
        %s586 = ssub.s32 %s10, 2
        // Predicated region
        $region68: #{upconv3d_block.6} parent=66 // pred_check
          %p587 = pneg %p128
        $region69: #{upconv3d_block.6} parent=66 // pred_check_branch
          %589 = sbr.rel (%p587) target = $region71
        $region70: #{upconv3d_block.6} parent=66 // pred_region
          %s590 = smul.u32 4, %s16
          %p591 = scmp.lt.s32.totalorder %s590, 7
          %s592 = scalar_select %p591, %s590, 7
          %s593 = smul.addr %s592, 4
          %s594 = scalar_lea.vmem %s4, %s593
        $region71: #{upconv3d_block.6} parent=66 // pred_fallthru
          _
      $region67: #{upconv3d_block.6} parent=5 // pred_fallthru
        _
    $region6: #{upconv3d_block.6} parent=1 // loop_footer
      %s14 = sadd.s32 1, %s10
    $region7: #{upconv3d_block.6} parent=1 // loop_footer_branch
      %9 = sbr.rel target = $region3
    $region8: #{upconv3d_block.6} parent=1 // loop_exit
      _

// kernel: upconv3d_block.7
$region0: #{upconv3d_block.7}
  #allocation0 [shape = 'u32[]', space=smem, size = 0x4, offset = 0x4, fixed_abs, tag = 'smem constant byte address 0x4 - core index']
  #allocation1 [shape = 'u32[144,128]{1,0:T(1,128)}', space=vmem, size = 0x12000, scoped, tag = 'internal scratch']
  %s0 = inlined_call_operand.vmem [shape: bf16[3,4], index: 0, kind: input, shape index: {}]
  %s1 = inlined_call_operand.vmem [shape: bf16[4,1024], index: 1, kind: input, shape index: {}]
  %s2 = inlined_call_operand.vmem [shape: f32[3,1], index: 2, kind: input, shape index: {}]
  %s3 = inlined_call_operand.vmem [shape: f32[3,1], index: 3, kind: input, shape index: {}]
  %s4 = inlined_call_operand.vmem [shape: f32[3,1024], index: 4, kind: output, shape index: {}]
  %s5 = sld [smem:[#allocation0]]
  $region49: #{upconv3d_block.7} parent=0
    _
  %s7 = ssub.s32 1, %s5
  %s8 = scalar_select 0, %s7, %s5
  loop: start=0, step=1, limit=4
  $region2: #{upconv3d_block.7} parent=0 // loop_pre_header
    _
  $region3: #{upconv3d_block.7} parent=0 // loop_header
    %s10 = sphi 0, %s14
    %p11 = scmp.ge.s32.totalorder %s10, 4
    %s18 = sphi 0, %s18
    %s20 = sphi 0, %s18
    %s21 = sphi 0, %s20
    %s35 = sphi 0, %s21
    %s41 = sphi 0, %s43
    %s44 = sphi 0, %s41
    %s45 = sphi 0, %s44
    %s61 = sphi 0, %s45
    %s65 = sphi 0, %s65
    %s67 = sphi 0, %s65
    %s68 = sphi 0, %s67
    %s82 = sphi 0, %s68
    %s86 = sphi 0, %s86
    %s88 = sphi 0, %s86
    %s89 = sphi 0, %s88
    %s103 = sphi 0, %s89
    %s109 = sphi 0, %s111
    %s112 = sphi 0, %s109
    %s113 = sphi 0, %s112
    %s129 = sphi 0, %s113
  $region4: #{upconv3d_block.7} parent=0 // loop_header_branch
    %13 = sbr.rel (%p11) target = $region8
  $region5: #{upconv3d_block.7} parent=0 // loop_body
    %s15 = ssub.s32 %s10, 1
    %s16 = ssub.s32 %s10, 2
    %s17 = sadd.s32 %s10, 1
    %s19 = sadd.s32 %s18, 1
    %p22 = scmp.eq.s32.totalorder %s10, 1
    %p23 = scmp.ne.s32.totalorder %s18, %s20
    %p24 = scmp.eq.s32.totalorder %s10, 0
    %p25 = por %p23, %p24
    %p26 = scmp.ne.s32.totalorder %s18, %s20
    %p27 = scmp.eq.s32.totalorder %s15, 1
    %p28 = por %p26, %p27
    %p29 = scmp.ne.s32.totalorder %s20, %s21
    %p30 = scmp.eq.s32.totalorder %s15, 0
    %p31 = por %p29, %p30
    %p32 = scmp.ne.s32.totalorder %s20, %s21
    %p33 = scmp.eq.s32.totalorder %s16, 1
    %p34 = por %p32, %p33
    %p36 = scmp.ne.s32.totalorder %s21, %s35
    %p37 = scmp.eq.s32.totalorder %s16, 0
    %p38 = por %p36, %p37
    %s39 = ssub.s32 %s10, %s17
    %p40 = scmp.eq.s32.totalorder %s39, 0
    %s42 = sadd.s32 %s41, 1
    %s43 = scalar_select %p40, %s41, %s42
    %p46 = pneg %p40
    %p47 = scmp.eq.s32.totalorder %s10, 1
    %p48 = por %p46, %p47
    %p49 = scmp.ne.s32.totalorder %s41, %s44
    %p50 = scmp.eq.s32.totalorder %s10, 0
    %p51 = por %p49, %p50
    %p52 = scmp.ne.s32.totalorder %s41, %s44
    %p53 = scmp.eq.s32.totalorder %s15, 1
    %p54 = por %p52, %p53
    %p55 = scmp.ne.s32.totalorder %s44, %s45
    %p56 = scmp.eq.s32.totalorder %s15, 0
    %p57 = por %p55, %p56
    %p58 = scmp.ne.s32.totalorder %s44, %s45
    %p59 = scmp.eq.s32.totalorder %s16, 1
    %p60 = por %p58, %p59
    %p62 = scmp.ne.s32.totalorder %s45, %s61
    %p63 = scmp.eq.s32.totalorder %s16, 0
    %p64 = por %p62, %p63
    %s66 = sadd.s32 %s65, 1
    %p69 = scmp.eq.s32.totalorder %s10, 1
    %p70 = scmp.ne.s32.totalorder %s65, %s67
    %p71 = scmp.eq.s32.totalorder %s10, 0
    %p72 = por %p70, %p71
    %p73 = scmp.ne.s32.totalorder %s65, %s67
    %p74 = scmp.eq.s32.totalorder %s15, 1
    %p75 = por %p73, %p74
    %p76 = scmp.ne.s32.totalorder %s67, %s68
    %p77 = scmp.eq.s32.totalorder %s15, 0
    %p78 = por %p76, %p77
    %p79 = scmp.ne.s32.totalorder %s67, %s68
    %p80 = scmp.eq.s32.totalorder %s16, 1
    %p81 = por %p79, %p80
    %p83 = scmp.ne.s32.totalorder %s68, %s82
    %p84 = scmp.eq.s32.totalorder %s16, 0
    %p85 = por %p83, %p84
    %s87 = sadd.s32 %s86, 1
    %p90 = scmp.eq.s32.totalorder %s10, 1
    %p91 = scmp.ne.s32.totalorder %s86, %s88
    %p92 = scmp.eq.s32.totalorder %s10, 0
    %p93 = por %p91, %p92
    %p94 = scmp.ne.s32.totalorder %s86, %s88
    %p95 = scmp.eq.s32.totalorder %s15, 1
    %p96 = por %p94, %p95
    %p97 = scmp.ne.s32.totalorder %s88, %s89
    %p98 = scmp.eq.s32.totalorder %s15, 0
    %p99 = por %p97, %p98
    %p100 = scmp.ne.s32.totalorder %s88, %s89
    %p101 = scmp.eq.s32.totalorder %s16, 1
    %p102 = por %p100, %p101
    %p104 = scmp.ne.s32.totalorder %s89, %s103
    %p105 = scmp.eq.s32.totalorder %s16, 0
    %p106 = por %p104, %p105
    %s107 = ssub.s32 %s10, %s17
    %p108 = scmp.eq.s32.totalorder %s107, 0
    %s110 = sadd.s32 %s109, 1
    %s111 = scalar_select %p108, %s109, %s110
    %p114 = pneg %p108
    %p115 = scmp.eq.s32.totalorder %s10, 1
    %p116 = por %p114, %p115
    %p117 = scmp.ne.s32.totalorder %s109, %s112
    %p118 = scmp.eq.s32.totalorder %s10, 0
    %p119 = por %p117, %p118
    %p120 = scmp.ne.s32.totalorder %s109, %s112
    %p121 = scmp.eq.s32.totalorder %s15, 1
    %p122 = por %p120, %p121
    %p123 = scmp.ne.s32.totalorder %s112, %s113
    %p124 = scmp.eq.s32.totalorder %s15, 0
    %p125 = por %p123, %p124
    %p126 = scmp.ne.s32.totalorder %s112, %s113
    %p127 = scmp.eq.s32.totalorder %s16, 1
    %p128 = por %p126, %p127
    %p130 = scmp.ne.s32.totalorder %s113, %s129
    %p131 = scmp.eq.s32.totalorder %s16, 0
    %p132 = por %p130, %p131
    %p133 = scmp.le.s32.totalorder 1, %s10
    %p134 = scmp.lt.s32.totalorder %s10, 3
    %p135 = pnand %p133, %p134
    %p136 = pneg %p135
    // Predicated region
    $region9: #{upconv3d_block.7} parent=5 // pred_check
      _
    $region10: #{upconv3d_block.7} parent=5 // pred_check_branch
      %138 = sbr.rel (%p135) target = $region12
    $region11: #{upconv3d_block.7} parent=5 // pred_region
      %s139 = ssub.s32 %s10, 1
      // Predicated region
      $region13: #{upconv3d_block.7} parent=11 // pred_check
        %p140 = pneg %p31
      $region14: #{upconv3d_block.7} parent=11 // pred_check_branch
        %142 = sbr.rel (%p140) target = $region16
      $region15: #{upconv3d_block.7} parent=11 // pred_region
        _
      $region16: #{upconv3d_block.7} parent=11 // pred_fallthru
        _
      // Predicated region
      $region17: #{upconv3d_block.7} parent=11 // pred_check
        %p143 = pneg %p78
      $region18: #{upconv3d_block.7} parent=11 // pred_check_branch
        %145 = sbr.rel (%p143) target = $region20
      $region19: #{upconv3d_block.7} parent=11 // pred_region
        _
      $region20: #{upconv3d_block.7} parent=11 // pred_fallthru
        _
      // Predicated region
      $region21: #{upconv3d_block.7} parent=11 // pred_check
        %p146 = pneg %p99
      $region22: #{upconv3d_block.7} parent=11 // pred_check_branch
        %148 = sbr.rel (%p146) target = $region24
      $region23: #{upconv3d_block.7} parent=11 // pred_region
        _
      $region24: #{upconv3d_block.7} parent=11 // pred_fallthru
        _
    $region12: #{upconv3d_block.7} parent=5 // pred_fallthru
      _
    %p149 = scmp.lt.s32.totalorder %s10, 2
    // Predicated region
    $region25: #{upconv3d_block.7} parent=5 // pred_check
      %p150 = pneg %p149
    $region26: #{upconv3d_block.7} parent=5 // pred_check_branch
      %152 = sbr.rel (%p150) target = $region28
    $region27: #{upconv3d_block.7} parent=5 // pred_region
      // Predicated region
      $region29: #{upconv3d_block.7} parent=27 // pred_check
        %p153 = pneg %p51
      $region30: #{upconv3d_block.7} parent=27 // pred_check_branch
        %155 = sbr.rel (%p153) target = $region32
      $region31: #{upconv3d_block.7} parent=27 // pred_region
        %s156 = smul.u32 4, %s10
        %p157 = scmp.lt.s32.totalorder %s156, 7
        %s158 = scalar_select %p157, %s156, 7
        %s159 = smul.addr %s158, 2
        %s160 = scalar_lea.vmem %s1, %s159
        %s161 = smul.u32 4, %s10
      $region32: #{upconv3d_block.7} parent=27 // pred_fallthru
        _
    $region28: #{upconv3d_block.7} parent=5 // pred_fallthru
      _
    %p162 = scmp.le.s32.totalorder 1, %s10
    %p163 = scmp.lt.s32.totalorder %s10, 3
    %p164 = pnand %p162, %p163
    %p165 = pneg %p164
    // Predicated region
    $region33: #{upconv3d_block.7} parent=5 // pred_check
      _
    $region34: #{upconv3d_block.7} parent=5 // pred_check_branch
      %167 = sbr.rel (%p164) target = $region36
    $region35: #{upconv3d_block.7} parent=5 // pred_region
      %s168 = ssub.s32 %s10, 1
      %p169 = pneg %p31
      %p170 = pneg %p28
      %s171 = smul.u32 4, %s15
      %p172 = scmp.lt.s32.totalorder %s171, 7
      %s173 = scalar_select %p172, %s171, 7
      %s174 = smul.addr %s173, 2
      %s175 = scalar_lea.vmem %s1, %s174
      %p176 = pneg %p57
      %p177 = pneg %p54
      %p178 = pneg %p78
      %p179 = pneg %p75
      %p180 = pneg %p99
      %p181 = pneg %p96
      %p182 = pneg %p125
      %p183 = pneg %p122
      %s184 = smul.u32 4, %s15
      %p185 = scmp.lt.s32.totalorder %s184, 7
      %s186 = scalar_select %p185, %s184, 7
      %s187 = smul.addr %s186, 4
      %s188 = scalar_lea.vmem %s4, %s187
      %s189 = smul.u32 4, %s15
      %p190 = scmp.lt.s32.totalorder %s189, 7
      %s191 = scalar_select %p190, %s189, 7
      %s192 = smul.addr %s191, 2
      %s193 = scalar_lea.vmem %s1, %s192
      %s194 = smul.u32 4, %s15
      %s195 = smul.u32 4, %s15
      %p196 = scmp.lt.s32.totalorder %s195, 7
      %s197 = scalar_select %p196, %s195, 7
      %s198 = smul.addr %s197, 4
      %s199 = scalar_lea.vmem %s4, %s198
      %s200 = smul.u32 4, %s15
      %v202 = vld [vmem:[%s0] sm:$0x3]
      %v203 = vld [vmem:[%s193] sm:$0xff]
      %v205 = vcombine.high %v203, %v203
      %v207 = vunpack.c.l.s4 1983009808
      %v208 = vunpack.c.0.s8 %v207
      %v209 = vlaneseq
      %v210 = vshrl.u32 %v209, 7
      %v211 = vsub.s32 %v208, %v210
      %v212 = vrot.slane %v203, %v211
      %v214 = vunpack.c.l.s4 1983009808
      %v215 = vunpack.c.0.s8 %v214
      %v216 = vlaneseq
      %v217 = vshrl.u32 %v216, 7
      %v218 = vsub.s32 %v215, %v217
      %v219 = vrot.slane %v205, %v218
      %v220 = vcombine.high %v212, %v212
      %v221 = vcombine.high %v219, %v219
      %vm222 = vcmask 31744
      %v224 = vsel %vm222, %v202, 0
      %vm226 = vcmask 1041408
      %v228 = vsel %vm226, %v212, 0
      %v231 = vsel %vm226, %v220, 0
      %v234 = vsel %vm226, %v219, 0
      %v237 = vsel %vm226, %v221, 0
      %239 = vmatprep.subr.bf16.mxu0 %v231
      %240 = vmatpush1.bf16.msra.mxu0 %v228
      %241 = vmatprep.subr.bf16.mxu0 0
      %242 = vmatpush1.bf16.msra.mxu0 0
      %243 = vmatprep.subr.bf16.mxu0 0
      %244 = vmatpush1.bf16.msra.mxu0 0
      %245 = vmatprep.subr.bf16.mxu0 0
      %246 = vmatpush1.bf16.msra.mxu0 0
      %247 = vmatprep.subr.bf16.mxu0 0
      %248 = vmatpush1.bf16.msra.mxu0 0
      %249 = vmatprep.subr.bf16.mxu0 0
      %250 = vmatpush1.bf16.msra.mxu0 0
      %251 = vmatprep.subr.bf16.mxu0 0
      %252 = vmatpush1.bf16.msra.mxu0 0
      %253 = vmatprep.subr.bf16.mxu0 0
      %254 = vmatpush1.bf16.msra.mxu0 0
      %255 = vmatprep.subr.bf16.mxu0 0
      %256 = vmatpush1.bf16.msra.mxu0 0
      %257 = vmatprep.subr.bf16.mxu0 0
      %258 = vmatpush1.bf16.msra.mxu0 0
      %259 = vmatprep.subr.bf16.mxu0 0
      %260 = vmatpush1.bf16.msra.mxu0 0
      %261 = vmatprep.subr.bf16.mxu0 0
      %262 = vmatpush1.bf16.msra.mxu0 0
      %263 = vmatprep.subr.bf16.mxu0 0
      %264 = vmatpush1.bf16.msra.mxu0 0
      %265 = vmatprep.subr.bf16.mxu0 0
      %266 = vmatpush1.bf16.msra.mxu0 0
      %267 = vmatprep.subr.bf16.mxu0 0
      %268 = vmatpush1.bf16.msra.mxu0 0
      %269 = vmatprep.subr.bf16.mxu0 0
      %270 = vmatpush1.bf16.msra.mxu0 0
      %271 = vmatprep.mubr.bf16.mxu0 0
      %272 = vmatmul.mubr.bf16.gmra.mrb[0].mxu0 %v224
      %v273 = vpop.f32.mrb[0].mxu0
      %v274 = vadd.f32 0.0, %v273
      %v275 = vpop.f32.mrb[0].mxu0
      %v276 = vadd.f32 0.0, %v275
      %v277 = vpop.f32.mrb[0].mxu0
      %v278 = vpop.f32.mrb[0].mxu0
      %279 = vdwg.mxu0
      %280 = vmatprep.subr.bf16.mxu0 %v237
      %281 = vmatpush1.bf16.msra.mxu0 %v234
      %282 = vmatprep.subr.bf16.mxu0 0
      %283 = vmatpush1.bf16.msra.mxu0 0
      %284 = vmatprep.subr.bf16.mxu0 0
      %285 = vmatpush1.bf16.msra.mxu0 0
      %286 = vmatprep.subr.bf16.mxu0 0
      %287 = vmatpush1.bf16.msra.mxu0 0
      %288 = vmatprep.subr.bf16.mxu0 0
      %289 = vmatpush1.bf16.msra.mxu0 0
      %290 = vmatprep.subr.bf16.mxu0 0
      %291 = vmatpush1.bf16.msra.mxu0 0
      %292 = vmatprep.subr.bf16.mxu0 0
      %293 = vmatpush1.bf16.msra.mxu0 0
      %294 = vmatprep.subr.bf16.mxu0 0
      %295 = vmatpush1.bf16.msra.mxu0 0
      %296 = vmatprep.subr.bf16.mxu0 0
      %297 = vmatpush1.bf16.msra.mxu0 0
      %298 = vmatprep.subr.bf16.mxu0 0
      %299 = vmatpush1.bf16.msra.mxu0 0
      %300 = vmatprep.subr.bf16.mxu0 0
      %301 = vmatpush1.bf16.msra.mxu0 0
      %302 = vmatprep.subr.bf16.mxu0 0
      %303 = vmatpush1.bf16.msra.mxu0 0
      %304 = vmatprep.subr.bf16.mxu0 0
      %305 = vmatpush1.bf16.msra.mxu0 0
      %306 = vmatprep.subr.bf16.mxu0 0
      %307 = vmatpush1.bf16.msra.mxu0 0
      %308 = vmatprep.subr.bf16.mxu0 0
      %309 = vmatpush1.bf16.msra.mxu0 0
      %310 = vmatprep.subr.bf16.mxu0 0
      %311 = vmatpush1.bf16.msra.mxu0 0
      %312 = vmatprep.mubr.bf16.mxu0 0
      %313 = vmatmul.mubr.bf16.gmra.mrb[0].mxu0 %v224
      %v314 = vpop.f32.mrb[0].mxu0
      %v315 = vadd.f32 0.0, %v314
      %v316 = vpop.f32.mrb[0].mxu0
      %v317 = vadd.f32 0.0, %v316
      %v318 = vpop.f32.mrb[0].mxu0
      %v319 = vpop.f32.mrb[0].mxu0
      %320 = vdwg.mxu0
      %v321 = vld [vmem:[%s2] sm:$0x7]
      %323 = vset.pattern.permute.xlu0 0
      %324 = vperm.xlu0 %323, %v321
      %v325 = vpop.permute.xlu0 %324
      %v327 = vmul.f32 %v274, %v325
      %v328 = vmul.f32 %v276, %v325
      %v329 = vmul.f32 %v315, %v325
      %v330 = vmul.f32 %v317, %v325
      %v331 = vld [vmem:[%s3] sm:$0x7]
      %333 = vset.pattern.permute.xlu0 0
      %334 = vperm.xlu0 %333, %v331
      %v335 = vpop.permute.xlu0 %334
      %v337 = vadd.f32 %v327, %v335
      %v338 = vadd.f32 %v328, %v335
      %v339 = vadd.f32 %v329, %v335
      %v340 = vadd.f32 %v330, %v335
      %v345 = vcombine.low %v337, %v338
      %v346 = vcombine.low %v339, %v340
      %349 = vst [vmem:[%s199] sm:$0x77] %v345
      %350 = vst [vmem:[%s199 + $0x8] sm:$0x77] %v346
      %s351 = smul.u32 4, %s15
      %p352 = scmp.lt.s32.totalorder %s351, 7
      %s353 = scalar_select %p352, %s351, 7
      %s354 = smul.addr %s353, 4
      %s355 = scalar_lea.vmem %s4, %s354
      // Predicated region
      $region37: #{upconv3d_block.7} parent=35 // pred_check
        %p356 = pneg %p122
      $region38: #{upconv3d_block.7} parent=35 // pred_check_branch
        %358 = sbr.rel (%p356) target = $region40
      $region39: #{upconv3d_block.7} parent=35 // pred_region
        %s359 = smul.u32 4, %s15
      $region40: #{upconv3d_block.7} parent=35 // pred_fallthru
        _
    $region36: #{upconv3d_block.7} parent=5 // pred_fallthru
      _
    %p360 = scmp.le.s32.totalorder 2, %s10
    // Predicated region
    $region41: #{upconv3d_block.7} parent=5 // pred_check
      %p361 = pneg %p360
    $region42: #{upconv3d_block.7} parent=5 // pred_check_branch
      %363 = sbr.rel (%p361) target = $region44
    $region43: #{upconv3d_block.7} parent=5 // pred_region
      %s364 = ssub.s32 %s10, 2
      // Predicated region
      $region45: #{upconv3d_block.7} parent=43 // pred_check
        %p365 = pneg %p128
      $region46: #{upconv3d_block.7} parent=43 // pred_check_branch
        %367 = sbr.rel (%p365) target = $region48
      $region47: #{upconv3d_block.7} parent=43 // pred_region
        %s368 = smul.u32 4, %s16
        %p369 = scmp.lt.s32.totalorder %s368, 7
        %s370 = scalar_select %p369, %s368, 7
        %s371 = smul.addr %s370, 4
        %s372 = scalar_lea.vmem %s4, %s371
      $region48: #{upconv3d_block.7} parent=43 // pred_fallthru
        _
    $region44: #{upconv3d_block.7} parent=5 // pred_fallthru
      _
  $region6: #{upconv3d_block.7} parent=0 // loop_footer
    %s14 = sadd.s32 1, %s10
  $region7: #{upconv3d_block.7} parent=0 // loop_footer_branch
    %9 = sbr.rel target = $region3
  $region8: #{upconv3d_block.7} parent=0 // loop_exit
    _

</llo_original>
